<compile_context>
chip_gen: v7x
topology: tpu7x:2x2x1
jax: 0.10.0
libtpu: 0.0.40
codegen_flags: <defaults>
</compile_context>

<pallas_src>
import jax
import jax.numpy as jnp
from jax.experimental import pallas as pl
from jax.experimental.pallas import tpu as pltpu


def _make_lstm_scan_kernel(n_features: int, include_h: bool, split_k: bool):
    """Kernel specialized at trace time.

    include_h: whether the weight contains the state-to-state half (always
               True for T > 1; False only for a single step with h=None,
               where that half contributes exactly zero and is dropped).
    split_k:   two K=F accumulating dots (v5e) vs one fused K=2F dot (v6e/v7x).
    """
    nf = n_features

    def kernel(x_ref, h0_ref, c0_ref, w_ref, b_ref,
               hs_ref, c_last_ref, h_sc, c_sc):
        t = pl.program_id(0)

        @pl.when(t == 0)
        def _init():
            h_sc[...] = h0_ref[...].astype(jnp.float32)
            c_sc[...] = c0_ref[...].astype(jnp.float32)

        x_t = x_ref[0].astype(jnp.float32)          # (B, F)
        h_prev = h_sc[...]                          # (B, F) f32
        c_prev = c_sc[...]                          # (B, F) f32

        # Weight-only compression: weights may be bf16 in HBM/VMEM; up-cast
        # here so gate math and accumulation stay f32.
        if include_h:
            if split_k:
                # v5e: MXU is 128-deep, so the K=2F fusion has no MXU win;
                # avoid the lane-concat and accumulate two K=F dots instead.
                acc = jnp.dot(x_t, w_ref[0:nf, :].astype(jnp.float32),
                              preferred_element_type=jnp.float32)
                acc = acc + jnp.dot(h_prev,
                                    w_ref[nf:2 * nf, :].astype(jnp.float32),
                                    preferred_element_type=jnp.float32)
            else:
                # v6e/v7x: one fused K=2F dot fills the 256-deep MXU.
                lhs = jnp.concatenate([x_t, h_prev], axis=-1)   # (B, 2F)
                acc = jnp.dot(lhs, w_ref[...].astype(jnp.float32),
                              preferred_element_type=jnp.float32)
        else:
            # Single step with h=None: h-half of the weight was dropped at
            # trace time (w is (F, 4F)); its contribution is exactly zero.
            acc = jnp.dot(x_t, w_ref[...].astype(jnp.float32),
                          preferred_element_type=jnp.float32)

        fiog = acc + b_ref[...]                      # (B, 4F) f32

        # Module-verbatim gate math: split order f, i, o, g; no sigmoid/tanh
        # on the gates, only tanh on the new cell state.
        f = fiog[:, 0 * nf:1 * nf]
        i = fiog[:, 1 * nf:2 * nf]
        o = fiog[:, 2 * nf:3 * nf]
        g = fiog[:, 3 * nf:4 * nf]

        c_new = f * c_prev + i * g
        h_new = o * jnp.tanh(c_new)

        # Carry state in f32 VMEM scratch across timesteps (no drift).
        h_sc[...] = h_new
        c_sc[...] = c_new

        # Lane-dense per-step h output (last dim = F, multiple of 128).
        hs_ref[0] = h_new.astype(hs_ref.dtype)

        @pl.when(t == pl.num_programs(0) - 1)
        def _finalize():
            c_last_ref[...] = c_new.astype(c_last_ref.dtype)

    return kernel


def _lstm_scan_call(xs, h0, c0, w, bias, *, include_h, split_k,
                    out_dtype, cell_state_dtype, single_buffer_consts):
    T, B, F = xs.shape
    K = w.shape[0]

    kernel = _make_lstm_scan_kernel(F, include_h, split_k)

    step_spec_in = pl.BlockSpec((1, B, F), lambda t: (t, 0, 0))
    step_spec_out = pl.BlockSpec((1, B, F), lambda t: (t, 0, 0))
    const2 = lambda t: (0, 0)

    if single_buffer_consts:
        # Constant index_map + single buffer: weight/bias fetched from HBM
        # exactly once and resident in VMEM for the entire scan.
        w_spec = pl.BlockSpec((K, 4 * F), const2, pipeline_mode=pl.Buffered(1))
        b_spec = pl.BlockSpec((1, 4 * F), const2, pipeline_mode=pl.Buffered(1))
    else:
        w_spec = pl.BlockSpec((K, 4 * F), const2)
        b_spec = pl.BlockSpec((1, 4 * F), const2)

    in_specs = [
        step_spec_in,                        # x_t  (pipelined per timestep)
        pl.BlockSpec((B, F), const2),        # h0   (read once at t == 0)
        pl.BlockSpec((B, F), const2),        # c0   (read once at t == 0)
        w_spec,                              # fused weights, VMEM-resident
        b_spec,                              # fused bias (b_is + b_ss), f32
    ]
    out_specs = [
        step_spec_out,                       # h per timestep
        pl.BlockSpec((B, F), const2),        # final c (written at t == T-1)
    ]

    itemsize = jnp.dtype(out_dtype).itemsize
    bytes_accessed = int(
        xs.size * jnp.dtype(xs.dtype).itemsize
        + h0.size * jnp.dtype(h0.dtype).itemsize
        + c0.size * jnp.dtype(c0.dtype).itemsize
        + w.size * jnp.dtype(w.dtype).itemsize        # fetched once, resident
        + bias.size * 4
        + T * B * F * itemsize                        # hs out
        + B * F * jnp.dtype(cell_state_dtype).itemsize)
    cost = pl.CostEstimate(
        flops=int(T * (2 * B * K * 4 * F + 8 * B * F)),
        transcendentals=int(T * B * F),               # tanh
        bytes_accessed=bytes_accessed)

    grid_spec = pltpu.PrefetchScalarGridSpec(
        num_scalar_prefetch=0,
        grid=(T,),
        in_specs=in_specs,
        out_specs=out_specs,
        scratch_shapes=[pltpu.VMEM((B, F), jnp.float32),   # h carry (f32)
                        pltpu.VMEM((B, F), jnp.float32)],  # c carry (f32)
    )

    return pl.pallas_call(
        kernel,
        grid_spec=grid_spec,
        out_shape=(jax.ShapeDtypeStruct((T, B, F), out_dtype),
                   jax.ShapeDtypeStruct((B, F), cell_state_dtype)),
        compiler_params=pltpu.CompilerParams(
            dimension_semantics=("arbitrary",)),     # recurrence: sequential
        cost_estimate=cost,
    )(xs, h0, c0, w, bias)


def lstm_scan_pallas(xs, wis_t, b_is, wss_t, b_ss, h0=None, c0=None, *,
                     param_dtype=jnp.bfloat16, split_k=False,
                     cell_state_dtype=jnp.float32):
    """Fused LSTMCell scan over time.

    xs: (T, B, F).  wis_t/wss_t: (F, 4F) (= W.T of a PyTorch Linear).
    b_is/b_ss: (4F,).  Returns (hs, c_last) with hs: (T, B, F) in xs.dtype and
    c_last: (B, F) in cell_state_dtype (f32 by default — no bf16 state drift).
    """
    T, B, F = xs.shape
    out_dtype = xs.dtype

    # The h-half of the weight is only droppable for a single step with h=None.
    include_h = (h0 is not None) or (T > 1)

    if h0 is None:
        h0 = jnp.zeros((B, F), xs.dtype)
    if c0 is None:
        c0 = jnp.zeros((B, F), xs.dtype)

    # Fused bias: both biases always apply.
    bias = (b_is.astype(jnp.float32)
            + b_ss.astype(jnp.float32)).reshape(1, 4 * F)

    # Fused weight: K-concatenate so the kernel does one K=2F matmul
    # (or two K=F matmuls on v5e via split_k).
    if include_h:
        w = jnp.concatenate([wis_t, wss_t], axis=0)   # (2F, 4F)
    else:
        w = wis_t                                     # (F, 4F)
    if param_dtype is not None:
        w = w.astype(param_dtype)                     # weight-only compression

    kwargs = dict(include_h=include_h, split_k=split_k, out_dtype=out_dtype,
                  cell_state_dtype=cell_state_dtype)
    try:
        hs, c_last = _lstm_scan_call(xs, h0, c0, w, bias,
                                     single_buffer_consts=True, **kwargs)
    except Exception:
        # pl.Buffered(1) not supported in this build: fall back to default
        # double-buffering (costs one extra resident weight buffer in VMEM).
        hs, c_last = _lstm_scan_call(xs, h0, c0, w, bias,
                                     single_buffer_consts=False, **kwargs)
    return hs, c_last


def lstm_cell_pallas(x, wis_t, b_is, wss_t, b_ss, h=None, c=None, *,
                     param_dtype=jnp.bfloat16, split_k=False):
    """Module-faithful single-step forward: returns (h_new, c_new), each (B, F)."""
    hs, c_last = lstm_scan_pallas(x[None], wis_t, b_is, wss_t, b_ss,
                                  h0=h, c0=c, param_dtype=param_dtype,
                                  split_k=split_k)
    return hs[0], c_last.astype(x.dtype)


# ----------------------------- pure-JAX reference ---------------------------
def lstm_cell_ref(x, wis_t, b_is, wss_t, b_ss, h, c):
    hp = jax.lax.Precision.HIGHEST
    fiog = (jnp.dot(x, wis_t, precision=hp) + b_is
            + jnp.dot(h, wss_t, precision=hp) + b_ss)
    F = x.shape[-1]
    f, i, o, g = (fiog[:, 0:F], fiog[:, F:2 * F],
                  fiog[:, 2 * F:3 * F], fiog[:, 3 * F:4 * F])
    c_new = f * c + i * g
    h_new = o * jnp.tanh(c_new)
    return h_new, c_new


def lstm_scan_ref(xs, wis_t, b_is, wss_t, b_ss, h0, c0):
    h, c = h0, c0
    hs = []
    for t in range(xs.shape[0]):
        h, c = lstm_cell_ref(xs[t], wis_t, b_is, wss_t, b_ss, h, c)
        hs.append(h)
    return jnp.stack(hs), c


if __name__ == "__main__":
    B, F, T = 8, 128, 8   # batch, n_features (lane-aligned), timesteps
    key = jax.random.PRNGKey(0)
    kx, kxs, kh, kc, kw1, kb1, kw2, kb2 = jax.random.split(key, 8)

    x = jax.random.normal(kx, (B, F), dtype=jnp.float32)
    xs = jax.random.normal(kxs, (T, B, F), dtype=jnp.float32)
    h0 = jax.random.normal(kh, (B, F), dtype=jnp.float32)
    c0 = jax.random.normal(kc, (B, F), dtype=jnp.float32)

    # PyTorch-style Linear params: weight (4F, F), bias (4F,), stored transposed.
    bound = 1.0 / (F ** 0.5)
    W_is = jax.random.uniform(kw1, (4 * F, F), jnp.float32, -bound, bound)
    b_is = jax.random.uniform(kb1, (4 * F,), jnp.float32, -bound, bound)
    W_ss = jax.random.uniform(kw2, (4 * F, F), jnp.float32, -bound, bound)
    b_ss = jax.random.uniform(kb2, (4 * F,), jnp.float32, -bound, bound)
    wis_t, wss_t = W_is.T, W_ss.T

    # 1) single-step module forward, exact f32 weights, with states.
    h1, c1 = lstm_cell_pallas(x, wis_t, b_is, wss_t, b_ss, h0, c0,
                              param_dtype=jnp.float32)
    h1_ref, c1_ref = lstm_cell_ref(x, wis_t, b_is, wss_t, b_ss, h0, c0)

    # 2) single-step, default (zero) states.
    h2, c2 = lstm_cell_pallas(x, wis_t, b_is, wss_t, b_ss,
                              param_dtype=jnp.float32)
    zeros = jnp.zeros((B, F), jnp.float32)
    h2_ref, c2_ref = lstm_cell_ref(x, wis_t, b_is, wss_t, b_ss, zeros, zeros)

    # 3) fused time-scan, f32 weights, fused K=2F dot (v6e/v7x path).
    hs3, c3 = lstm_scan_pallas(xs, wis_t, b_is, wss_t, b_ss, h0, c0,
                               param_dtype=jnp.float32)
    hs_ref, c_last_ref = lstm_scan_ref(xs, wis_t, b_is, wss_t, b_ss, h0, c0)

    # 4) fused time-scan, split-K variant (v5e path).
    hs4, c4 = lstm_scan_pallas(xs, wis_t, b_is, wss_t, b_ss, h0, c0,
                               param_dtype=jnp.float32, split_k=True)

    # 5) fused time-scan, default bf16 weight-only compression.
    hs5, c5 = lstm_scan_pallas(xs, wis_t, b_is, wss_t, b_ss, h0, c0)
    wis_bf = wis_t.astype(jnp.bfloat16).astype(jnp.float32)
    wss_bf = wss_t.astype(jnp.bfloat16).astype(jnp.float32)
    hs5_ref, c5_ref = lstm_scan_ref(xs, wis_bf, b_is, wss_bf, b_ss, h0, c0)

    jax.block_until_ready((h1, c1, h2, c2, hs3, c3, hs4, c4, hs5, c5))

    def check(a, b, tol):
        assert jnp.allclose(a, b, atol=tol, rtol=tol), \
            f"max abs err {float(jnp.max(jnp.abs(a - b)))}"

    check(h1, h1_ref, 1e-2); check(c1, c1_ref, 1e-2)
    check(h2, h2_ref, 1e-2); check(c2, c2_ref, 1e-2)
    check(hs3, hs_ref, 3e-2); check(c3, c_last_ref, 3e-2)
    check(hs4, hs_ref, 3e-2); check(c4, c_last_ref, 3e-2)
    check(hs5, hs5_ref, 3e-2); check(c5, c5_ref, 3e-2)

    print("KERNEL_OK")
</pallas_src>

<mosaic_0001>
module attributes {stable_mosaic.version = 11 : i64} {
  func.func @kernel(%arg0: i32, %arg1: memref<1x8x128xf32, #tpu.memory_space<vmem>>, %arg2: memref<8x128xf32, #tpu.memory_space<vmem>>, %arg3: memref<8x128xf32, #tpu.memory_space<vmem>>, %arg4: memref<256x512xf32, #tpu.memory_space<vmem>>, %arg5: memref<1x512xf32, #tpu.memory_space<vmem>>, %arg6: memref<1x8x128xf32, #tpu.memory_space<vmem>>, %arg7: memref<8x128xf32, #tpu.memory_space<vmem>>, %arg8: memref<8x128xf32, #tpu.memory_space<vmem>>, %arg9: memref<8x128xf32, #tpu.memory_space<vmem>>) attributes {dimension_semantics = [#tpu.dimension_semantics<arbitrary>], iteration_bounds = array<i64: 1>, scalar_prefetch = 0 : i64, scratch_operands = 2 : i64, tpu.core_type = #tpu.core_type<tc>, window_params = [{transform_indices = @transform_0, window_bounds = array<i64: 1, 8, 128>}, {pipeline_mode = #tpu.pipeline_mode<synchronous>, transform_indices = @transform_1, window_bounds = array<i64: 8, 128>}, {pipeline_mode = #tpu.pipeline_mode<synchronous>, transform_indices = @transform_2, window_bounds = array<i64: 8, 128>}, {pipeline_mode = #tpu.pipeline_mode<synchronous>, transform_indices = @transform_3, window_bounds = array<i64: 256, 512>}, {pipeline_mode = #tpu.pipeline_mode<synchronous>, transform_indices = @transform_4, window_bounds = array<i64: 1, 512>}, {transform_indices = @transform_5, window_bounds = array<i64: 1, 8, 128>}, {pipeline_mode = #tpu.pipeline_mode<synchronous>, transform_indices = @transform_6, window_bounds = array<i64: 8, 128>}]} {
    %c0_i32 = arith.constant 0 : i32
    %0 = arith.cmpi eq, %arg0, %c0_i32 : i32
    %1 = arith.extui %0 : i1 to i32
    %c0_i32_0 = arith.constant 0 : i32
    %2 = arith.cmpi ne, %1, %c0_i32_0 : i32
    scf.if %2 {
      %c0_20 = arith.constant 0 : index
      %c0_21 = arith.constant 0 : index
      %30 = vector.load %arg2[%c0_20, %c0_21] : memref<8x128xf32, #tpu.memory_space<vmem>>, vector<8x128xf32>
      %c0_22 = arith.constant 0 : index
      %c0_23 = arith.constant 0 : index
      %31 = vector.load %arg8[%c0_22, %c0_23] : memref<8x128xf32, #tpu.memory_space<vmem>>, vector<8x128xf32>
      tpu.vector_store %arg8[%c0_22, %c0_23], %30 {strides = array<i32>} : memref<8x128xf32, #tpu.memory_space<vmem>>, vector<8x128xf32>,
      %c0_24 = arith.constant 0 : index
      %c0_25 = arith.constant 0 : index
      %32 = vector.load %arg3[%c0_24, %c0_25] : memref<8x128xf32, #tpu.memory_space<vmem>>, vector<8x128xf32>
      %c0_26 = arith.constant 0 : index
      %c0_27 = arith.constant 0 : index
      %33 = vector.load %arg9[%c0_26, %c0_27] : memref<8x128xf32, #tpu.memory_space<vmem>>, vector<8x128xf32>
      tpu.vector_store %arg9[%c0_26, %c0_27], %32 {strides = array<i32>} : memref<8x128xf32, #tpu.memory_space<vmem>>, vector<8x128xf32>,
    } else {
    }
    %c0 = arith.constant 0 : index
    %c0_1 = arith.constant 0 : index
    %c0_2 = arith.constant 0 : index
    %3 = vector.load %arg1[%c0, %c0_1, %c0_2] : memref<1x8x128xf32, #tpu.memory_space<vmem>>, vector<1x8x128xf32>
    %4 = vector.shape_cast %3 : vector<1x8x128xf32> to vector<8x128xf32>
    %c0_3 = arith.constant 0 : index
    %c0_4 = arith.constant 0 : index
    %5 = vector.load %arg8[%c0_3, %c0_4] : memref<8x128xf32, #tpu.memory_space<vmem>>, vector<8x128xf32>
    %c0_5 = arith.constant 0 : index
    %c0_6 = arith.constant 0 : index
    %6 = vector.load %arg9[%c0_5, %c0_6] : memref<8x128xf32, #tpu.memory_space<vmem>>, vector<8x128xf32>
    %7 = tpu.concatenate %4, %5 in 1 : vector<8x128xf32>, vector<8x128xf32> -> vector<8x256xf32>
    %c0_7 = arith.constant 0 : index
    %c0_8 = arith.constant 0 : index
    %8 = vector.load %arg4[%c0_7, %c0_8] : memref<256x512xf32, #tpu.memory_space<vmem>>, vector<256x512xf32>
    %cst = arith.constant dense<0.000000e+00> : vector<8x512xf32>
    %9 = tpu.matmul %7, %8, %cst {dimension_numbers = #tpu.dot_dimension_numbers<[1], [0], [0], [1], [0, 0, 1, 1], [], []>} : vector<8x256xf32>, vector<256x512xf32>, vector<8x512xf32> -> vector<8x512xf32>
    %c0_9 = arith.constant 0 : index
    %c0_10 = arith.constant 0 : index
    %10 = vector.load %arg5[%c0_9, %c0_10] : memref<1x512xf32, #tpu.memory_space<vmem>>, vector<1x512xf32>
    %11 = vector.broadcast %10 : vector<1x512xf32> to vector<8x512xf32>
    %12 = arith.addf %9, %11 : vector<8x512xf32>
    %13 = vector.extract_strided_slice %12 {offsets = [0, 0], sizes = [8, 128], strides = [1, 1]} : vector<8x512xf32> to vector<8x128xf32>
    %14 = vector.extract_strided_slice %12 {offsets = [0, 128], sizes = [8, 128], strides = [1, 1]} : vector<8x512xf32> to vector<8x128xf32>
    %15 = vector.extract_strided_slice %12 {offsets = [0, 256], sizes = [8, 128], strides = [1, 1]} : vector<8x512xf32> to vector<8x128xf32>
    %16 = vector.extract_strided_slice %12 {offsets = [0, 384], sizes = [8, 128], strides = [1, 1]} : vector<8x512xf32> to vector<8x128xf32>
    %17 = arith.mulf %13, %6 : vector<8x128xf32>
    %18 = arith.mulf %14, %16 : vector<8x128xf32>
    %19 = arith.addf %17, %18 : vector<8x128xf32>
    %20 = math.tanh %19 : vector<8x128xf32>
    %21 = arith.mulf %15, %20 : vector<8x128xf32>
    %c0_11 = arith.constant 0 : index
    %c0_12 = arith.constant 0 : index
    %22 = vector.load %arg8[%c0_11, %c0_12] : memref<8x128xf32, #tpu.memory_space<vmem>>, vector<8x128xf32>
    tpu.vector_store %arg8[%c0_11, %c0_12], %21 {strides = array<i32>} : memref<8x128xf32, #tpu.memory_space<vmem>>, vector<8x128xf32>,
    %c0_13 = arith.constant 0 : index
    %c0_14 = arith.constant 0 : index
    %23 = vector.load %arg9[%c0_13, %c0_14] : memref<8x128xf32, #tpu.memory_space<vmem>>, vector<8x128xf32>
    tpu.vector_store %arg9[%c0_13, %c0_14], %19 {strides = array<i32>} : memref<8x128xf32, #tpu.memory_space<vmem>>, vector<8x128xf32>,
    %c0_15 = arith.constant 0 : index
    %c0_16 = arith.constant 0 : index
    %c0_17 = arith.constant 0 : index
    %24 = vector.load %arg6[%c0_15, %c0_16, %c0_17] : memref<1x8x128xf32, #tpu.memory_space<vmem>>, vector<1x8x128xf32>
    %25 = vector.shape_cast %24 : vector<1x8x128xf32> to vector<8x128xf32>
    %26 = vector.shape_cast %21 : vector<8x128xf32> to vector<1x8x128xf32>
    tpu.vector_store %arg6[%c0_15, %c0_16, %c0_17], %26 {strides = array<i32>} : memref<1x8x128xf32, #tpu.memory_space<vmem>>, vector<1x8x128xf32>,
    %c0_i32_18 = arith.constant 0 : i32
    %27 = arith.cmpi eq, %arg0, %c0_i32_18 : i32
    %28 = arith.extui %27 : i1 to i32
    %c0_i32_19 = arith.constant 0 : i32
    %29 = arith.cmpi ne, %28, %c0_i32_19 : i32
    scf.if %29 {
      %c0_20 = arith.constant 0 : index
      %c0_21 = arith.constant 0 : index
      %30 = vector.load %arg7[%c0_20, %c0_21] : memref<8x128xf32, #tpu.memory_space<vmem>>, vector<8x128xf32>
      tpu.vector_store %arg7[%c0_20, %c0_21], %19 {strides = array<i32>} : memref<8x128xf32, #tpu.memory_space<vmem>>, vector<8x128xf32>,
    } else {
    }
    return
  }
  func.func @transform_0(%arg0: i32) -> (i32, i32, i32) {
    %c0_i32 = arith.constant 0 : i32
    %c0_i32_0 = arith.constant 0 : i32
    %c0_i32_1 = arith.constant 0 : i32
    return %arg0, %c0_i32, %c0_i32_0 : i32, i32, i32
  }
  func.func @transform_1(%arg0: i32) -> (i32, i32) {
    %c0_i32 = arith.constant 0 : i32
    %c0_i32_0 = arith.constant 0 : i32
    %c0_i32_1 = arith.constant 0 : i32
    return %c0_i32, %c0_i32_0 : i32, i32
  }
  func.func @transform_2(%arg0: i32) -> (i32, i32) {
    %c0_i32 = arith.constant 0 : i32
    %c0_i32_0 = arith.constant 0 : i32
    %c0_i32_1 = arith.constant 0 : i32
    return %c0_i32, %c0_i32_0 : i32, i32
  }
  func.func @transform_3(%arg0: i32) -> (i32, i32) {
    %c0_i32 = arith.constant 0 : i32
    %c0_i32_0 = arith.constant 0 : i32
    %c0_i32_1 = arith.constant 0 : i32
    return %c0_i32, %c0_i32_0 : i32, i32
  }
  func.func @transform_4(%arg0: i32) -> (i32, i32) {
    %c0_i32 = arith.constant 0 : i32
    %c0_i32_0 = arith.constant 0 : i32
    %c0_i32_1 = arith.constant 0 : i32
    return %c0_i32, %c0_i32_0 : i32, i32
  }
  func.func @transform_5(%arg0: i32) -> (i32, i32, i32) {
    %c0_i32 = arith.constant 0 : i32
    %c0_i32_0 = arith.constant 0 : i32
    %c0_i32_1 = arith.constant 0 : i32
    return %arg0, %c0_i32, %c0_i32_0 : i32, i32, i32
  }
  func.func @transform_6(%arg0: i32) -> (i32, i32) {
    %c0_i32 = arith.constant 0 : i32
    %c0_i32_0 = arith.constant 0 : i32
    %c0_i32_1 = arith.constant 0 : i32
    return %c0_i32, %c0_i32_0 : i32, i32
  }
}

module attributes {stable_mosaic.version = 11 : i64} {
  func.func @kernel(%arg0: i32, %arg1: memref<1x8x128xf32, #tpu.memory_space<vmem>>, %arg2: memref<8x128xf32, #tpu.memory_space<vmem>>, %arg3: memref<8x128xf32, #tpu.memory_space<vmem>>, %arg4: memref<256x512xf32, #tpu.memory_space<vmem>>, %arg5: memref<1x512xf32, #tpu.memory_space<vmem>>, %arg6: memref<1x8x128xf32, #tpu.memory_space<vmem>>, %arg7: memref<8x128xf32, #tpu.memory_space<vmem>>, %arg8: memref<8x128xf32, #tpu.memory_space<vmem>>, %arg9: memref<8x128xf32, #tpu.memory_space<vmem>>) attributes {dimension_semantics = [#tpu.dimension_semantics<arbitrary>], iteration_bounds = array<i64: 1>, scalar_prefetch = 0 : i64, scratch_operands = 2 : i64, tpu.core_type = #tpu.core_type<tc>, window_params = [{transform_indices = @transform_0, window_bounds = array<i64: 1, 8, 128>}, {pipeline_mode = #tpu.pipeline_mode<synchronous>, transform_indices = @transform_1, window_bounds = array<i64: 8, 128>}, {pipeline_mode = #tpu.pipeline_mode<synchronous>, transform_indices = @transform_2, window_bounds = array<i64: 8, 128>}, {pipeline_mode = #tpu.pipeline_mode<synchronous>, transform_indices = @transform_3, window_bounds = array<i64: 256, 512>}, {pipeline_mode = #tpu.pipeline_mode<synchronous>, transform_indices = @transform_4, window_bounds = array<i64: 1, 512>}, {transform_indices = @transform_5, window_bounds = array<i64: 1, 8, 128>}, {pipeline_mode = #tpu.pipeline_mode<synchronous>, transform_indices = @transform_6, window_bounds = array<i64: 8, 128>}]} {
    %c0_i32 = arith.constant 0 : i32
    %0 = arith.cmpi eq, %arg0, %c0_i32 : i32
    %1 = arith.extui %0 : i1 to i32
    %c0_i32_0 = arith.constant 0 : i32
    %2 = arith.cmpi ne, %1, %c0_i32_0 : i32
    scf.if %2 {
      %c0_20 = arith.constant 0 : index
      %c0_21 = arith.constant 0 : index
      %30 = vector.load %arg2[%c0_20, %c0_21] : memref<8x128xf32, #tpu.memory_space<vmem>>, vector<8x128xf32>
      %c0_22 = arith.constant 0 : index
      %c0_23 = arith.constant 0 : index
      %31 = vector.load %arg8[%c0_22, %c0_23] : memref<8x128xf32, #tpu.memory_space<vmem>>, vector<8x128xf32>
      tpu.vector_store %arg8[%c0_22, %c0_23], %30 {strides = array<i32>} : memref<8x128xf32, #tpu.memory_space<vmem>>, vector<8x128xf32>,
      %c0_24 = arith.constant 0 : index
      %c0_25 = arith.constant 0 : index
      %32 = vector.load %arg3[%c0_24, %c0_25] : memref<8x128xf32, #tpu.memory_space<vmem>>, vector<8x128xf32>
      %c0_26 = arith.constant 0 : index
      %c0_27 = arith.constant 0 : index
      %33 = vector.load %arg9[%c0_26, %c0_27] : memref<8x128xf32, #tpu.memory_space<vmem>>, vector<8x128xf32>
      tpu.vector_store %arg9[%c0_26, %c0_27], %32 {strides = array<i32>} : memref<8x128xf32, #tpu.memory_space<vmem>>, vector<8x128xf32>,
    } else {
    }
    %c0 = arith.constant 0 : index
    %c0_1 = arith.constant 0 : index
    %c0_2 = arith.constant 0 : index
    %3 = vector.load %arg1[%c0, %c0_1, %c0_2] : memref<1x8x128xf32, #tpu.memory_space<vmem>>, vector<1x8x128xf32>
    %4 = vector.shape_cast %3 : vector<1x8x128xf32> to vector<8x128xf32>
    %c0_3 = arith.constant 0 : index
    %c0_4 = arith.constant 0 : index
    %5 = vector.load %arg8[%c0_3, %c0_4] : memref<8x128xf32, #tpu.memory_space<vmem>>, vector<8x128xf32>
    %c0_5 = arith.constant 0 : index
    %c0_6 = arith.constant 0 : index
    %6 = vector.load %arg9[%c0_5, %c0_6] : memref<8x128xf32, #tpu.memory_space<vmem>>, vector<8x128xf32>
    %7 = tpu.concatenate %4, %5 in 1 : vector<8x128xf32>, vector<8x128xf32> -> vector<8x256xf32>
    %c0_7 = arith.constant 0 : index
    %c0_8 = arith.constant 0 : index
    %8 = vector.load %arg4[%c0_7, %c0_8] : memref<256x512xf32, #tpu.memory_space<vmem>>, vector<256x512xf32>
    %cst = arith.constant dense<0.000000e+00> : vector<8x512xf32>
    %9 = tpu.matmul %7, %8, %cst {dimension_numbers = #tpu.dot_dimension_numbers<[1], [0], [0], [1], [0, 0, 1, 1], [], []>} : vector<8x256xf32>, vector<256x512xf32>, vector<8x512xf32> -> vector<8x512xf32>
    %c0_9 = arith.constant 0 : index
    %c0_10 = arith.constant 0 : index
    %10 = vector.load %arg5[%c0_9, %c0_10] : memref<1x512xf32, #tpu.memory_space<vmem>>, vector<1x512xf32>
    %11 = vector.broadcast %10 : vector<1x512xf32> to vector<8x512xf32>
    %12 = arith.addf %9, %11 : vector<8x512xf32>
    %13 = vector.extract_strided_slice %12 {offsets = [0, 0], sizes = [8, 128], strides = [1, 1]} : vector<8x512xf32> to vector<8x128xf32>
    %14 = vector.extract_strided_slice %12 {offsets = [0, 128], sizes = [8, 128], strides = [1, 1]} : vector<8x512xf32> to vector<8x128xf32>
    %15 = vector.extract_strided_slice %12 {offsets = [0, 256], sizes = [8, 128], strides = [1, 1]} : vector<8x512xf32> to vector<8x128xf32>
    %16 = vector.extract_strided_slice %12 {offsets = [0, 384], sizes = [8, 128], strides = [1, 1]} : vector<8x512xf32> to vector<8x128xf32>
    %17 = arith.mulf %13, %6 : vector<8x128xf32>
    %18 = arith.mulf %14, %16 : vector<8x128xf32>
    %19 = arith.addf %17, %18 : vector<8x128xf32>
    %20 = math.tanh %19 : vector<8x128xf32>
    %21 = arith.mulf %15, %20 : vector<8x128xf32>
    %c0_11 = arith.constant 0 : index
    %c0_12 = arith.constant 0 : index
    %22 = vector.load %arg8[%c0_11, %c0_12] : memref<8x128xf32, #tpu.memory_space<vmem>>, vector<8x128xf32>
    tpu.vector_store %arg8[%c0_11, %c0_12], %21 {strides = array<i32>} : memref<8x128xf32, #tpu.memory_space<vmem>>, vector<8x128xf32>,
    %c0_13 = arith.constant 0 : index
    %c0_14 = arith.constant 0 : index
    %23 = vector.load %arg9[%c0_13, %c0_14] : memref<8x128xf32, #tpu.memory_space<vmem>>, vector<8x128xf32>
    tpu.vector_store %arg9[%c0_13, %c0_14], %19 {strides = array<i32>} : memref<8x128xf32, #tpu.memory_space<vmem>>, vector<8x128xf32>,
    %c0_15 = arith.constant 0 : index
    %c0_16 = arith.constant 0 : index
    %c0_17 = arith.constant 0 : index
    %24 = vector.load %arg6[%c0_15, %c0_16, %c0_17] : memref<1x8x128xf32, #tpu.memory_space<vmem>>, vector<1x8x128xf32>
    %25 = vector.shape_cast %24 : vector<1x8x128xf32> to vector<8x128xf32>
    %26 = vector.shape_cast %21 : vector<8x128xf32> to vector<1x8x128xf32>
    tpu.vector_store %arg6[%c0_15, %c0_16, %c0_17], %26 {strides = array<i32>} : memref<1x8x128xf32, #tpu.memory_space<vmem>>, vector<1x8x128xf32>,
    %c0_i32_18 = arith.constant 0 : i32
    %27 = arith.cmpi eq, %arg0, %c0_i32_18 : i32
    %28 = arith.extui %27 : i1 to i32
    %c0_i32_19 = arith.constant 0 : i32
    %29 = arith.cmpi ne, %28, %c0_i32_19 : i32
    scf.if %29 {
      %c0_20 = arith.constant 0 : index
      %c0_21 = arith.constant 0 : index
      %30 = vector.load %arg7[%c0_20, %c0_21] : memref<8x128xf32, #tpu.memory_space<vmem>>, vector<8x128xf32>
      tpu.vector_store %arg7[%c0_20, %c0_21], %19 {strides = array<i32>} : memref<8x128xf32, #tpu.memory_space<vmem>>, vector<8x128xf32>,
    } else {
    }
    return
  }
  func.func @transform_0(%arg0: i32) -> (i32, i32, i32) {
    %c0_i32 = arith.constant 0 : i32
    %c0_i32_0 = arith.constant 0 : i32
    %c0_i32_1 = arith.constant 0 : i32
    return %arg0, %c0_i32, %c0_i32_0 : i32, i32, i32
  }
  func.func @transform_1(%arg0: i32) -> (i32, i32) {
    %c0_i32 = arith.constant 0 : i32
    %c0_i32_0 = arith.constant 0 : i32
    %c0_i32_1 = arith.constant 0 : i32
    return %c0_i32, %c0_i32_0 : i32, i32
  }
  func.func @transform_2(%arg0: i32) -> (i32, i32) {
    %c0_i32 = arith.constant 0 : i32
    %c0_i32_0 = arith.constant 0 : i32
    %c0_i32_1 = arith.constant 0 : i32
    return %c0_i32, %c0_i32_0 : i32, i32
  }
  func.func @transform_3(%arg0: i32) -> (i32, i32) {
    %c0_i32 = arith.constant 0 : i32
    %c0_i32_0 = arith.constant 0 : i32
    %c0_i32_1 = arith.constant 0 : i32
    return %c0_i32, %c0_i32_0 : i32, i32
  }
  func.func @transform_4(%arg0: i32) -> (i32, i32) {
    %c0_i32 = arith.constant 0 : i32
    %c0_i32_0 = arith.constant 0 : i32
    %c0_i32_1 = arith.constant 0 : i32
    return %c0_i32, %c0_i32_0 : i32, i32
  }
  func.func @transform_5(%arg0: i32) -> (i32, i32, i32) {
    %c0_i32 = arith.constant 0 : i32
    %c0_i32_0 = arith.constant 0 : i32
    %c0_i32_1 = arith.constant 0 : i32
    return %arg0, %c0_i32, %c0_i32_0 : i32, i32, i32
  }
  func.func @transform_6(%arg0: i32) -> (i32, i32) {
    %c0_i32 = arith.constant 0 : i32
    %c0_i32_0 = arith.constant 0 : i32
    %c0_i32_1 = arith.constant 0 : i32
    return %c0_i32, %c0_i32_0 : i32, i32
  }
}

</mosaic_0001>

<llo_original>
// kernel: tpu_custom_call.1
$region0: #{tpu_custom_call.1}
  #allocation0 [shape = 'u32[]', space=smem, size = 0x4, offset = 0x4, fixed_abs, tag = 'smem constant byte address 0x4 - core index']
  #allocation1 [shape = 'u32[144,128]{1,0:T(1,128)}', space=vmem, size = 0x12000, scoped, tag = 'internal scratch']
  #allocation2 [shape = 'f32[8,128]{1,0:T(8,128)}', space=vmem, size = 0x1000, scoped, tag = 'scratch operand']
  #allocation3 [shape = 'f32[8,128]{1,0:T(8,128)}', space=vmem, size = 0x1000, scoped, tag = 'scratch operand']
  %s0 = inlined_call_operand.hbm [shape: f32[1,8,128], index: 0, kind: input, shape index: {}]
  %s1 = inlined_call_operand.hbm [shape: f32[8,128], index: 1, kind: input, shape index: {}]
  %s2 = inlined_call_operand.hbm [shape: f32[8,128], index: 2, kind: input, shape index: {}]
  %s3 = inlined_call_operand.hbm [shape: f32[256,512], index: 3, kind: input, shape index: {}]
  %s4 = inlined_call_operand.vmem [shape: f32[1,512], index: 4, kind: input, shape index: {}]
  %s5 = inlined_call_operand.hbm [shape: f32[1,8,128], index: 5, kind: output, shape index: {0}]
  %s6 = inlined_call_operand.hbm [shape: f32[8,128], index: 6, kind: output, shape index: {1}]
  %7 = xla_tuple %s5, %s6
  %s8 = sld [smem:[#allocation0]]
  $region62: #{tpu_custom_call.1} parent=0
    _
  %s10 = ssub.s32 1, %s8
  %s11 = scalar_select 0, %s10, %s8
  $region1: #{tpu_custom_call.1} parent=0
    #allocation4 [shape = 'u8[4096]{0}', space=vmem, size = 0x1000, scoped, tag = 'input window, operand 0, single buffered']
    #allocation5 [shape = 's32[1]{0}', space=sflag, size = 0x4, scoped, tag = 'scoped memory for tpu_custom_call.1']
    #allocation6 [shape = 's32[1]{0}', space=sflag, size = 0x4, scoped, tag = 'scoped memory for tpu_custom_call.1']
    #allocation7 [shape = 'u8[4096]{0}', space=vmem, size = 0x1000, scoped, tag = 'input window, operand 1, single buffered']
    #allocation8 [shape = 's32[1]{0}', space=sflag, size = 0x4, scoped, tag = 'scoped memory for tpu_custom_call.1']
    #allocation9 [shape = 'u8[4096]{0}', space=vmem, size = 0x1000, scoped, tag = 'input window, operand 2, single buffered']
    #allocation10 [shape = 'u8[524288]{0}', space=vmem, size = 0x80000, scoped, tag = 'input window, operand 3, single buffered']
    #allocation11 [shape = 's32[1]{0}', space=sflag, size = 0x4, scoped, tag = 'scoped memory for tpu_custom_call.1']
    #allocation12 [shape = 'u8[4096]{0}', space=vmem, size = 0x1000, scoped, tag = 'output window, operand 0, single buffered']
    #allocation13 [shape = 'u8[4096]{0}', space=vmem, size = 0x1000, scoped, tag = 'output window, operand 1, single buffered']
    #allocation14 [shape = 's32[1]{0}', space=sflag, size = 0x4, scoped, tag = 'scoped memory for tpu_custom_call.1']
    %12 = vsyncpa [#allocation5], 0
    %13 = vsyncpa [#allocation8], 0
    %14 = vsyncpa [#allocation11], 0
    %15 = vsyncpa [#allocation6], 0
    %16 = vsyncpa [#allocation14], 0
    // Predicated region
    $region2: #{tpu_custom_call.1} parent=1 // pred_check
      _
    $region3: #{tpu_custom_call.1} parent=1 // pred_check_branch
      %18 = sbr.rel (0) target = $region5
    $region4: #{tpu_custom_call.1} parent=1 // pred_region
      %s20 = ssub.s32 128, 128
      %21 = vsyncadd [#allocation5], %s20
      %s23 = sshll.u32 [#allocation4], 4
      %s24 = int_to_ptr.vmem [resolvable:$true] %s23
      %26 = dma.hbm_to_vmem [thread:$0]  %s0, 128, %s24, [#allocation5]
    $region5: #{tpu_custom_call.1} parent=1 // pred_fallthru
      _
    // Predicated region
    $region6: #{tpu_custom_call.1} parent=1 // pred_check
      _
    $region7: #{tpu_custom_call.1} parent=1 // pred_check_branch
      %28 = sbr.rel (0) target = $region9
    $region8: #{tpu_custom_call.1} parent=1 // pred_region
      %s30 = ssub.s32 128, 128
      %31 = vsyncadd [#allocation8], %s30
      %s33 = sshll.u32 [#allocation7], 4
      %s34 = int_to_ptr.vmem [resolvable:$true] %s33
      %36 = dma.hbm_to_vmem [thread:$0]  %s1, 128, %s34, [#allocation8]
    $region9: #{tpu_custom_call.1} parent=1 // pred_fallthru
      _
    // Predicated region
    $region10: #{tpu_custom_call.1} parent=1 // pred_check
      _
    $region11: #{tpu_custom_call.1} parent=1 // pred_check_branch
      %38 = sbr.rel (0) target = $region13
    $region12: #{tpu_custom_call.1} parent=1 // pred_region
      %s40 = ssub.s32 128, 128
      %41 = vsyncadd [#allocation8], %s40
      %s43 = sshll.u32 [#allocation9], 4
      %s44 = int_to_ptr.vmem [resolvable:$true] %s43
      %46 = dma.hbm_to_vmem [thread:$0]  %s2, 128, %s44, [#allocation8]
    $region13: #{tpu_custom_call.1} parent=1 // pred_fallthru
      _
    // Predicated region
    $region14: #{tpu_custom_call.1} parent=1 // pred_check
      _
    $region15: #{tpu_custom_call.1} parent=1 // pred_check_branch
      %48 = sbr.rel (0) target = $region17
    $region16: #{tpu_custom_call.1} parent=1 // pred_region
      %s50 = ssub.s32 16384, 16384
      %51 = vsyncadd [#allocation11], %s50
      %s52 = sshll.u32 [#allocation10], 4
      %s53 = int_to_ptr.vmem [resolvable:$true] %s52
      %58 = dma.hbm_to_vmem [thread:$0]  %s3, 16384, %s53, [#allocation11], 512, 512, 32
    $region17: #{tpu_custom_call.1} parent=1 // pred_fallthru
      _
    // Predicated region
    $region18: #{tpu_custom_call.1} parent=1 // pred_check
      _
    $region19: #{tpu_custom_call.1} parent=1 // pred_check_branch
      %60 = sbr.rel (0) target = $region21
    $region20: #{tpu_custom_call.1} parent=1 // pred_region
      _
    $region21: #{tpu_custom_call.1} parent=1 // pred_fallthru
      _
    // Predicated region
    $region22: #{tpu_custom_call.1} parent=1 // pred_check
      _
    $region23: #{tpu_custom_call.1} parent=1 // pred_check_branch
      %62 = sbr.rel (0) target = $region25
    $region24: #{tpu_custom_call.1} parent=1 // pred_region
      %63 = dma.done [#allocation5], 128
    $region25: #{tpu_custom_call.1} parent=1 // pred_fallthru
      _
    // Predicated region
    $region26: #{tpu_custom_call.1} parent=1 // pred_check
      _
    $region27: #{tpu_custom_call.1} parent=1 // pred_check_branch
      %65 = sbr.rel (0) target = $region29
    $region28: #{tpu_custom_call.1} parent=1 // pred_region
      %66 = dma.done [#allocation8], 128
    $region29: #{tpu_custom_call.1} parent=1 // pred_fallthru
      _
    // Predicated region
    $region30: #{tpu_custom_call.1} parent=1 // pred_check
      _
    $region31: #{tpu_custom_call.1} parent=1 // pred_check_branch
      %68 = sbr.rel (0) target = $region33
    $region32: #{tpu_custom_call.1} parent=1 // pred_region
      %69 = dma.done [#allocation8], 128
    $region33: #{tpu_custom_call.1} parent=1 // pred_fallthru
      _
    // Predicated region
    $region34: #{tpu_custom_call.1} parent=1 // pred_check
      _
    $region35: #{tpu_custom_call.1} parent=1 // pred_check_branch
      %71 = sbr.rel (0) target = $region37
    $region36: #{tpu_custom_call.1} parent=1 // pred_region
      %72 = dma.done [#allocation11], 16384
    $region37: #{tpu_custom_call.1} parent=1 // pred_fallthru
      _
    %p73 = scmp.eq.s32.totalorder 0, 0
    // Predicated region
    $region38: #{tpu_custom_call.1} parent=1 // pred_check
      %p74 = pneg %p73
    $region39: #{tpu_custom_call.1} parent=1 // pred_check_branch
      %76 = sbr.rel (%p74) target = $region41
    $region40: #{tpu_custom_call.1} parent=1 // pred_region
      %v77 = vld [vmem:[#allocation7] sm:$0xff]
      %78 = vst [vmem:[#allocation2] sm:$0xff] %v77
      %v79 = vld [vmem:[#allocation9] sm:$0xff]
      %80 = vst [vmem:[#allocation3] sm:$0xff] %v79
    $region41: #{tpu_custom_call.1} parent=1 // pred_fallthru
      _
    %v81 = vld [vmem:[#allocation4] sm:$0xff]
    %v82 = vld [vmem:[#allocation2] sm:$0xff]
    %v83 = vld [vmem:[#allocation3] sm:$0xff]
    %v84 = vld [vmem:[#allocation10] sm:$0xff]
    %v85 = vld [vmem:[#allocation10 + $0x8] sm:$0xff]
    %v86 = vld [vmem:[#allocation10 + $0x10] sm:$0xff]
    %v87 = vld [vmem:[#allocation10 + $0x18] sm:$0xff]
    %v88 = vld [vmem:[#allocation10 + $0x20] sm:$0xff]
    %v89 = vld [vmem:[#allocation10 + $0x28] sm:$0xff]
    %v90 = vld [vmem:[#allocation10 + $0x30] sm:$0xff]
    %v91 = vld [vmem:[#allocation10 + $0x38] sm:$0xff]
    %v92 = vld [vmem:[#allocation10 + $0x40] sm:$0xff]
    %v93 = vld [vmem:[#allocation10 + $0x48] sm:$0xff]
    %v94 = vld [vmem:[#allocation10 + $0x50] sm:$0xff]
    %v95 = vld [vmem:[#allocation10 + $0x58] sm:$0xff]
    %v96 = vld [vmem:[#allocation10 + $0x60] sm:$0xff]
    %v97 = vld [vmem:[#allocation10 + $0x68] sm:$0xff]
    %v98 = vld [vmem:[#allocation10 + $0x70] sm:$0xff]
    %v99 = vld [vmem:[#allocation10 + $0x78] sm:$0xff]
    %v100 = vld [vmem:[#allocation10 + $0x80] sm:$0xff]
    %v101 = vld [vmem:[#allocation10 + $0x88] sm:$0xff]
    %v102 = vld [vmem:[#allocation10 + $0x90] sm:$0xff]
    %v103 = vld [vmem:[#allocation10 + $0x98] sm:$0xff]
    %v104 = vld [vmem:[#allocation10 + $0xa0] sm:$0xff]
    %v105 = vld [vmem:[#allocation10 + $0xa8] sm:$0xff]
    %v106 = vld [vmem:[#allocation10 + $0xb0] sm:$0xff]
    %v107 = vld [vmem:[#allocation10 + $0xb8] sm:$0xff]
    %v108 = vld [vmem:[#allocation10 + $0xc0] sm:$0xff]
    %v109 = vld [vmem:[#allocation10 + $0xc8] sm:$0xff]
    %v110 = vld [vmem:[#allocation10 + $0xd0] sm:$0xff]
    %v111 = vld [vmem:[#allocation10 + $0xd8] sm:$0xff]
    %v112 = vld [vmem:[#allocation10 + $0xe0] sm:$0xff]
    %v113 = vld [vmem:[#allocation10 + $0xe8] sm:$0xff]
    %v114 = vld [vmem:[#allocation10 + $0xf0] sm:$0xff]
    %v115 = vld [vmem:[#allocation10 + $0xf8] sm:$0xff]
    %v116 = vld [vmem:[#allocation10 + $0x100] sm:$0xff]
    %v117 = vld [vmem:[#allocation10 + $0x108] sm:$0xff]
    %v118 = vld [vmem:[#allocation10 + $0x110] sm:$0xff]
    %v119 = vld [vmem:[#allocation10 + $0x118] sm:$0xff]
    %v120 = vld [vmem:[#allocation10 + $0x120] sm:$0xff]
    %v121 = vld [vmem:[#allocation10 + $0x128] sm:$0xff]
    %v122 = vld [vmem:[#allocation10 + $0x130] sm:$0xff]
    %v123 = vld [vmem:[#allocation10 + $0x138] sm:$0xff]
    %v124 = vld [vmem:[#allocation10 + $0x140] sm:$0xff]
    %v125 = vld [vmem:[#allocation10 + $0x148] sm:$0xff]
    %v126 = vld [vmem:[#allocation10 + $0x150] sm:$0xff]
    %v127 = vld [vmem:[#allocation10 + $0x158] sm:$0xff]
    %v128 = vld [vmem:[#allocation10 + $0x160] sm:$0xff]
    %v129 = vld [vmem:[#allocation10 + $0x168] sm:$0xff]
    %v130 = vld [vmem:[#allocation10 + $0x170] sm:$0xff]
    %v131 = vld [vmem:[#allocation10 + $0x178] sm:$0xff]
    %v132 = vld [vmem:[#allocation10 + $0x180] sm:$0xff]
    %v133 = vld [vmem:[#allocation10 + $0x188] sm:$0xff]
    %v134 = vld [vmem:[#allocation10 + $0x190] sm:$0xff]
    %v135 = vld [vmem:[#allocation10 + $0x198] sm:$0xff]
    %v136 = vld [vmem:[#allocation10 + $0x1a0] sm:$0xff]
    %v137 = vld [vmem:[#allocation10 + $0x1a8] sm:$0xff]
    %v138 = vld [vmem:[#allocation10 + $0x1b0] sm:$0xff]
    %v139 = vld [vmem:[#allocation10 + $0x1b8] sm:$0xff]
    %v140 = vld [vmem:[#allocation10 + $0x1c0] sm:$0xff]
    %v141 = vld [vmem:[#allocation10 + $0x1c8] sm:$0xff]
    %v142 = vld [vmem:[#allocation10 + $0x1d0] sm:$0xff]
    %v143 = vld [vmem:[#allocation10 + $0x1d8] sm:$0xff]
    %v144 = vld [vmem:[#allocation10 + $0x1e0] sm:$0xff]
    %v145 = vld [vmem:[#allocation10 + $0x1e8] sm:$0xff]
    %v146 = vld [vmem:[#allocation10 + $0x1f0] sm:$0xff]
    %v147 = vld [vmem:[#allocation10 + $0x1f8] sm:$0xff]
    %v148 = vld [vmem:[#allocation10 + $0x200] sm:$0xff]
    %v149 = vld [vmem:[#allocation10 + $0x208] sm:$0xff]
    %v150 = vld [vmem:[#allocation10 + $0x210] sm:$0xff]
    %v151 = vld [vmem:[#allocation10 + $0x218] sm:$0xff]
    %v152 = vld [vmem:[#allocation10 + $0x220] sm:$0xff]
    %v153 = vld [vmem:[#allocation10 + $0x228] sm:$0xff]
    %v154 = vld [vmem:[#allocation10 + $0x230] sm:$0xff]
    %v155 = vld [vmem:[#allocation10 + $0x238] sm:$0xff]
    %v156 = vld [vmem:[#allocation10 + $0x240] sm:$0xff]
    %v157 = vld [vmem:[#allocation10 + $0x248] sm:$0xff]
    %v158 = vld [vmem:[#allocation10 + $0x250] sm:$0xff]
    %v159 = vld [vmem:[#allocation10 + $0x258] sm:$0xff]
    %v160 = vld [vmem:[#allocation10 + $0x260] sm:$0xff]
    %v161 = vld [vmem:[#allocation10 + $0x268] sm:$0xff]
    %v162 = vld [vmem:[#allocation10 + $0x270] sm:$0xff]
    %v163 = vld [vmem:[#allocation10 + $0x278] sm:$0xff]
    %v164 = vld [vmem:[#allocation10 + $0x280] sm:$0xff]
    %v165 = vld [vmem:[#allocation10 + $0x288] sm:$0xff]
    %v166 = vld [vmem:[#allocation10 + $0x290] sm:$0xff]
    %v167 = vld [vmem:[#allocation10 + $0x298] sm:$0xff]
    %v168 = vld [vmem:[#allocation10 + $0x2a0] sm:$0xff]
    %v169 = vld [vmem:[#allocation10 + $0x2a8] sm:$0xff]
    %v170 = vld [vmem:[#allocation10 + $0x2b0] sm:$0xff]
    %v171 = vld [vmem:[#allocation10 + $0x2b8] sm:$0xff]
    %v172 = vld [vmem:[#allocation10 + $0x2c0] sm:$0xff]
    %v173 = vld [vmem:[#allocation10 + $0x2c8] sm:$0xff]
    %v174 = vld [vmem:[#allocation10 + $0x2d0] sm:$0xff]
    %v175 = vld [vmem:[#allocation10 + $0x2d8] sm:$0xff]
    %v176 = vld [vmem:[#allocation10 + $0x2e0] sm:$0xff]
    %v177 = vld [vmem:[#allocation10 + $0x2e8] sm:$0xff]
    %v178 = vld [vmem:[#allocation10 + $0x2f0] sm:$0xff]
    %v179 = vld [vmem:[#allocation10 + $0x2f8] sm:$0xff]
    %v180 = vld [vmem:[#allocation10 + $0x300] sm:$0xff]
    %v181 = vld [vmem:[#allocation10 + $0x308] sm:$0xff]
    %v182 = vld [vmem:[#allocation10 + $0x310] sm:$0xff]
    %v183 = vld [vmem:[#allocation10 + $0x318] sm:$0xff]
    %v184 = vld [vmem:[#allocation10 + $0x320] sm:$0xff]
    %v185 = vld [vmem:[#allocation10 + $0x328] sm:$0xff]
    %v186 = vld [vmem:[#allocation10 + $0x330] sm:$0xff]
    %v187 = vld [vmem:[#allocation10 + $0x338] sm:$0xff]
    %v188 = vld [vmem:[#allocation10 + $0x340] sm:$0xff]
    %v189 = vld [vmem:[#allocation10 + $0x348] sm:$0xff]
    %v190 = vld [vmem:[#allocation10 + $0x350] sm:$0xff]
    %v191 = vld [vmem:[#allocation10 + $0x358] sm:$0xff]
    %v192 = vld [vmem:[#allocation10 + $0x360] sm:$0xff]
    %v193 = vld [vmem:[#allocation10 + $0x368] sm:$0xff]
    %v194 = vld [vmem:[#allocation10 + $0x370] sm:$0xff]
    %v195 = vld [vmem:[#allocation10 + $0x378] sm:$0xff]
    %v196 = vld [vmem:[#allocation10 + $0x380] sm:$0xff]
    %v197 = vld [vmem:[#allocation10 + $0x388] sm:$0xff]
    %v198 = vld [vmem:[#allocation10 + $0x390] sm:$0xff]
    %v199 = vld [vmem:[#allocation10 + $0x398] sm:$0xff]
    %v200 = vld [vmem:[#allocation10 + $0x3a0] sm:$0xff]
    %v201 = vld [vmem:[#allocation10 + $0x3a8] sm:$0xff]
    %v202 = vld [vmem:[#allocation10 + $0x3b0] sm:$0xff]
    %v203 = vld [vmem:[#allocation10 + $0x3b8] sm:$0xff]
    %v204 = vld [vmem:[#allocation10 + $0x3c0] sm:$0xff]
    %v205 = vld [vmem:[#allocation10 + $0x3c8] sm:$0xff]
    %v206 = vld [vmem:[#allocation10 + $0x3d0] sm:$0xff]
    %v207 = vld [vmem:[#allocation10 + $0x3d8] sm:$0xff]
    %v208 = vld [vmem:[#allocation10 + $0x3e0] sm:$0xff]
    %v209 = vld [vmem:[#allocation10 + $0x3e8] sm:$0xff]
    %v210 = vld [vmem:[#allocation10 + $0x3f0] sm:$0xff]
    %v211 = vld [vmem:[#allocation10 + $0x3f8] sm:$0xff]
    %v212 = vld [vmem:[%s4] sm:$0xf]
    %v214 = vlaneseq
    %v215 = vshrl.u32 %v214, 7
    %v216 = vsub.s32 0, %v215
    %v217 = vrot.slane %v212, %v216
    %v218 = vlaneseq
    %v219 = vshrl.u32 %v218, 7
    %v220 = vsub.s32 1, %v219
    %v221 = vrot.slane %v212, %v220
    %v222 = vlaneseq
    %v223 = vshrl.u32 %v222, 7
    %v224 = vsub.s32 2, %v223
    %v225 = vrot.slane %v212, %v224
    %v226 = vlaneseq
    %v227 = vshrl.u32 %v226, 7
    %v228 = vsub.s32 3, %v227
    %v229 = vrot.slane %v212, %v228
    %234 = vmatprep.subr.mxu0 %v85
    %235 = vmatpush1.msra.mxu0 %v84
    %236 = vmatprep.subr.mxu0 %v89
    %237 = vmatpush1.msra.mxu0 %v88
    %238 = vmatprep.subr.mxu0 %v93
    %239 = vmatpush1.msra.mxu0 %v92
    %240 = vmatprep.subr.mxu0 %v97
    %241 = vmatpush1.msra.mxu0 %v96
    %242 = vmatprep.subr.mxu0 %v101
    %243 = vmatpush1.msra.mxu0 %v100
    %244 = vmatprep.subr.mxu0 %v105
    %245 = vmatpush1.msra.mxu0 %v104
    %246 = vmatprep.subr.mxu0 %v109
    %247 = vmatpush1.msra.mxu0 %v108
    %248 = vmatprep.subr.mxu0 %v113
    %249 = vmatpush1.msra.mxu0 %v112
    %250 = vmatprep.subr.mxu0 %v117
    %251 = vmatpush1.msra.mxu0 %v116
    %252 = vmatprep.subr.mxu0 %v121
    %253 = vmatpush1.msra.mxu0 %v120
    %254 = vmatprep.subr.mxu0 %v125
    %255 = vmatpush1.msra.mxu0 %v124
    %256 = vmatprep.subr.mxu0 %v129
    %257 = vmatpush1.msra.mxu0 %v128
    %258 = vmatprep.subr.mxu0 %v133
    %259 = vmatpush1.msra.mxu0 %v132
    %260 = vmatprep.subr.mxu0 %v137
    %261 = vmatpush1.msra.mxu0 %v136
    %262 = vmatprep.subr.mxu0 %v141
    %263 = vmatpush1.msra.mxu0 %v140
    %264 = vmatprep.subr.mxu0 %v145
    %265 = vmatpush1.msra.mxu0 %v144
    %266 = vmatprep.subr.mxu0 %v149
    %267 = vmatpush1.msra.mxu0 %v148
    %268 = vmatprep.subr.mxu0 %v153
    %269 = vmatpush1.msra.mxu0 %v152
    %270 = vmatprep.subr.mxu0 %v157
    %271 = vmatpush1.msra.mxu0 %v156
    %272 = vmatprep.subr.mxu0 %v161
    %273 = vmatpush1.msra.mxu0 %v160
    %274 = vmatprep.subr.mxu0 %v165
    %275 = vmatpush1.msra.mxu0 %v164
    %276 = vmatprep.subr.mxu0 %v169
    %277 = vmatpush1.msra.mxu0 %v168
    %278 = vmatprep.subr.mxu0 %v173
    %279 = vmatpush1.msra.mxu0 %v172
    %280 = vmatprep.subr.mxu0 %v177
    %281 = vmatpush1.msra.mxu0 %v176
    %282 = vmatprep.subr.mxu0 %v181
    %283 = vmatpush1.msra.mxu0 %v180
    %284 = vmatprep.subr.mxu0 %v185
    %285 = vmatpush1.msra.mxu0 %v184
    %286 = vmatprep.subr.mxu0 %v189
    %287 = vmatpush1.msra.mxu0 %v188
    %288 = vmatprep.subr.mxu0 %v193
    %289 = vmatpush1.msra.mxu0 %v192
    %290 = vmatprep.subr.mxu0 %v197
    %291 = vmatpush1.msra.mxu0 %v196
    %292 = vmatprep.subr.mxu0 %v201
    %293 = vmatpush1.msra.mxu0 %v200
    %294 = vmatprep.subr.mxu0 %v205
    %295 = vmatpush1.msra.mxu0 %v204
    %296 = vmatprep.subr.mxu0 %v209
    %297 = vmatpush1.msra.mxu0 %v208
    %298 = vmatprep.mubr.f32.mxu0 %v82
    %299 = vmatmul.mubr.f32.gmra.mrb[0].mxu0 %v81
    %v300 = vpop.f32.mrb[0].mxu0
    %v301 = vadd.f32 %v217, %v300
    %v302 = vpop.f32.mrb[0].mxu0
    %v303 = vadd.f32 %v221, %v302
    %304 = vdwg.mxu0
    %305 = vmatprep.subr.mxu0 %v87
    %306 = vmatpush1.msra.mxu0 %v86
    %307 = vmatprep.subr.mxu0 %v91
    %308 = vmatpush1.msra.mxu0 %v90
    %309 = vmatprep.subr.mxu0 %v95
    %310 = vmatpush1.msra.mxu0 %v94
    %311 = vmatprep.subr.mxu0 %v99
    %312 = vmatpush1.msra.mxu0 %v98
    %313 = vmatprep.subr.mxu0 %v103
    %314 = vmatpush1.msra.mxu0 %v102
    %315 = vmatprep.subr.mxu0 %v107
    %316 = vmatpush1.msra.mxu0 %v106
    %317 = vmatprep.subr.mxu0 %v111
    %318 = vmatpush1.msra.mxu0 %v110
    %319 = vmatprep.subr.mxu0 %v115
    %320 = vmatpush1.msra.mxu0 %v114
    %321 = vmatprep.subr.mxu0 %v119
    %322 = vmatpush1.msra.mxu0 %v118
    %323 = vmatprep.subr.mxu0 %v123
    %324 = vmatpush1.msra.mxu0 %v122
    %325 = vmatprep.subr.mxu0 %v127
    %326 = vmatpush1.msra.mxu0 %v126
    %327 = vmatprep.subr.mxu0 %v131
    %328 = vmatpush1.msra.mxu0 %v130
    %329 = vmatprep.subr.mxu0 %v135
    %330 = vmatpush1.msra.mxu0 %v134
    %331 = vmatprep.subr.mxu0 %v139
    %332 = vmatpush1.msra.mxu0 %v138
    %333 = vmatprep.subr.mxu0 %v143
    %334 = vmatpush1.msra.mxu0 %v142
    %335 = vmatprep.subr.mxu0 %v147
    %336 = vmatpush1.msra.mxu0 %v146
    %337 = vmatprep.subr.mxu0 %v151
    %338 = vmatpush1.msra.mxu0 %v150
    %339 = vmatprep.subr.mxu0 %v155
    %340 = vmatpush1.msra.mxu0 %v154
    %341 = vmatprep.subr.mxu0 %v159
    %342 = vmatpush1.msra.mxu0 %v158
    %343 = vmatprep.subr.mxu0 %v163
    %344 = vmatpush1.msra.mxu0 %v162
    %345 = vmatprep.subr.mxu0 %v167
    %346 = vmatpush1.msra.mxu0 %v166
    %347 = vmatprep.subr.mxu0 %v171
    %348 = vmatpush1.msra.mxu0 %v170
    %349 = vmatprep.subr.mxu0 %v175
    %350 = vmatpush1.msra.mxu0 %v174
    %351 = vmatprep.subr.mxu0 %v179
    %352 = vmatpush1.msra.mxu0 %v178
    %353 = vmatprep.subr.mxu0 %v183
    %354 = vmatpush1.msra.mxu0 %v182
    %355 = vmatprep.subr.mxu0 %v187
    %356 = vmatpush1.msra.mxu0 %v186
    %357 = vmatprep.subr.mxu0 %v191
    %358 = vmatpush1.msra.mxu0 %v190
    %359 = vmatprep.subr.mxu0 %v195
    %360 = vmatpush1.msra.mxu0 %v194
    %361 = vmatprep.subr.mxu0 %v199
    %362 = vmatpush1.msra.mxu0 %v198
    %363 = vmatprep.subr.mxu0 %v203
    %364 = vmatpush1.msra.mxu0 %v202
    %365 = vmatprep.subr.mxu0 %v207
    %366 = vmatpush1.msra.mxu0 %v206
    %367 = vmatprep.subr.mxu0 %v211
    %368 = vmatpush1.msra.mxu0 %v210
    %369 = vmatprep.mubr.f32.mxu0 %v82
    %370 = vmatmul.mubr.f32.gmra.mrb[0].mxu0 %v81
    %v371 = vpop.f32.mrb[0].mxu0
    %v372 = vadd.f32 %v225, %v371
    %v373 = vpop.f32.mrb[0].mxu0
    %v374 = vadd.f32 %v229, %v373
    %375 = vdwg.mxu0
    %v376 = vmul.f32 %v301, %v83
    %v377 = vmul.f32 %v303, %v374
    %v378 = vadd.f32 %v376, %v377
    %v379 = vtanh.pop %v378
    %v380 = vmul.f32 %v372, %v379
    %381 = vst [vmem:[#allocation2] sm:$0xff] %v380
    %382 = vst [vmem:[#allocation3] sm:$0xff] %v378
    %383 = vst [vmem:[#allocation12] sm:$0xff] %v380
    // Predicated region
    $region42: #{tpu_custom_call.1} parent=1 // pred_check
      %p384 = pneg %p73
    $region43: #{tpu_custom_call.1} parent=1 // pred_check_branch
      %386 = sbr.rel (%p384) target = $region45
    $region44: #{tpu_custom_call.1} parent=1 // pred_region
      %387 = vst [vmem:[#allocation13] sm:$0xff] %v378
    $region45: #{tpu_custom_call.1} parent=1 // pred_fallthru
      _
    // Predicated region
    $region46: #{tpu_custom_call.1} parent=1 // pred_check
      _
    $region47: #{tpu_custom_call.1} parent=1 // pred_check_branch
      %389 = sbr.rel (0) target = $region49
    $region48: #{tpu_custom_call.1} parent=1 // pred_region
      %s391 = ssub.s32 128, 128
      %392 = vsyncadd [#allocation6], %s391
      %s394 = sshll.u32 [#allocation12], 4
      %s395 = int_to_ptr.vmem [resolvable:$true] %s394
      %397 = dma.vmem_to_hbm [thread:$0]  %s395, 128, %s5, [#allocation6]
    $region49: #{tpu_custom_call.1} parent=1 // pred_fallthru
      _
    // Predicated region
    $region50: #{tpu_custom_call.1} parent=1 // pred_check
      _
    $region51: #{tpu_custom_call.1} parent=1 // pred_check_branch
      %399 = sbr.rel (0) target = $region53
    $region52: #{tpu_custom_call.1} parent=1 // pred_region
      %s401 = ssub.s32 128, 128
      %402 = vsyncadd [#allocation14], %s401
      %s404 = sshll.u32 [#allocation13], 4
      %s405 = int_to_ptr.vmem [resolvable:$true] %s404
      %407 = dma.vmem_to_hbm [thread:$0]  %s405, 128, %s6, [#allocation14]
    $region53: #{tpu_custom_call.1} parent=1 // pred_fallthru
      _
    // Predicated region
    $region54: #{tpu_custom_call.1} parent=1 // pred_check
      _
    $region55: #{tpu_custom_call.1} parent=1 // pred_check_branch
      %409 = sbr.rel (0) target = $region57
    $region56: #{tpu_custom_call.1} parent=1 // pred_region
      %410 = dma.done [#allocation6], 128
    $region57: #{tpu_custom_call.1} parent=1 // pred_fallthru
      _
    // Predicated region
    $region58: #{tpu_custom_call.1} parent=1 // pred_check
      _
    $region59: #{tpu_custom_call.1} parent=1 // pred_check_branch
      %412 = sbr.rel (0) target = $region61
    $region60: #{tpu_custom_call.1} parent=1 // pred_region
      %413 = dma.done [#allocation14], 128
    $region61: #{tpu_custom_call.1} parent=1 // pred_fallthru
      _
    %414 = vsyncpa [#allocation5], 1
    %415 = vsyncpa [#allocation8], 1
    %416 = vsyncpa [#allocation11], 1
    %417 = vsyncpa [#allocation6], 1
    %418 = vsyncpa [#allocation14], 1

// kernel: tpu_custom_call.1
$region0: #{tpu_custom_call.1}
  #allocation0 [shape = 'u32[]', space=smem, size = 0x4, offset = 0x4, fixed_abs, tag = 'smem constant byte address 0x4 - core index']
  #allocation1 [shape = 'u32[144,128]{1,0:T(1,128)}', space=vmem, size = 0x12000, scoped, tag = 'internal scratch']
  #allocation2 [shape = 'f32[8,128]{1,0:T(8,128)}', space=vmem, size = 0x1000, scoped, tag = 'scratch operand']
  #allocation3 [shape = 'f32[8,128]{1,0:T(8,128)}', space=vmem, size = 0x1000, scoped, tag = 'scratch operand']
  %s0 = inlined_call_operand.hbm [shape: f32[1,8,128], index: 0, kind: input, shape index: {}]
  %s1 = inlined_call_operand.hbm [shape: f32[8,128], index: 1, kind: input, shape index: {}]
  %s2 = inlined_call_operand.hbm [shape: f32[8,128], index: 2, kind: input, shape index: {}]
  %s3 = inlined_call_operand.hbm [shape: f32[256,512], index: 3, kind: input, shape index: {}]
  %s4 = inlined_call_operand.vmem [shape: f32[1,512], index: 4, kind: input, shape index: {}]
  %s5 = inlined_call_operand.hbm [shape: f32[1,8,128], index: 5, kind: output, shape index: {0}]
  %s6 = inlined_call_operand.hbm [shape: f32[8,128], index: 6, kind: output, shape index: {1}]
  %7 = xla_tuple %s5, %s6
  %s8 = sld [smem:[#allocation0]]
  $region62: #{tpu_custom_call.1} parent=0
    _
  %s10 = ssub.s32 1, %s8
  %s11 = scalar_select 0, %s10, %s8
  $region1: #{tpu_custom_call.1} parent=0
    #allocation4 [shape = 'u8[4096]{0}', space=vmem, size = 0x1000, scoped, tag = 'input window, operand 0, single buffered']
    #allocation5 [shape = 's32[1]{0}', space=sflag, size = 0x4, scoped, tag = 'scoped memory for tpu_custom_call.1']
    #allocation6 [shape = 's32[1]{0}', space=sflag, size = 0x4, scoped, tag = 'scoped memory for tpu_custom_call.1']
    #allocation7 [shape = 'u8[4096]{0}', space=vmem, size = 0x1000, scoped, tag = 'input window, operand 1, single buffered']
    #allocation8 [shape = 's32[1]{0}', space=sflag, size = 0x4, scoped, tag = 'scoped memory for tpu_custom_call.1']
    #allocation9 [shape = 'u8[4096]{0}', space=vmem, size = 0x1000, scoped, tag = 'input window, operand 2, single buffered']
    #allocation10 [shape = 'u8[524288]{0}', space=vmem, size = 0x80000, scoped, tag = 'input window, operand 3, single buffered']
    #allocation11 [shape = 's32[1]{0}', space=sflag, size = 0x4, scoped, tag = 'scoped memory for tpu_custom_call.1']
    #allocation12 [shape = 'u8[4096]{0}', space=vmem, size = 0x1000, scoped, tag = 'output window, operand 0, single buffered']
    #allocation13 [shape = 'u8[4096]{0}', space=vmem, size = 0x1000, scoped, tag = 'output window, operand 1, single buffered']
    #allocation14 [shape = 's32[1]{0}', space=sflag, size = 0x4, scoped, tag = 'scoped memory for tpu_custom_call.1']
    %12 = vsyncpa [#allocation5], 0
    %13 = vsyncpa [#allocation8], 0
    %14 = vsyncpa [#allocation11], 0
    %15 = vsyncpa [#allocation6], 0
    %16 = vsyncpa [#allocation14], 0
    // Predicated region
    $region2: #{tpu_custom_call.1} parent=1 // pred_check
      _
    $region3: #{tpu_custom_call.1} parent=1 // pred_check_branch
      %18 = sbr.rel (0) target = $region5
    $region4: #{tpu_custom_call.1} parent=1 // pred_region
      %s20 = ssub.s32 128, 128
      %21 = vsyncadd [#allocation5], %s20
      %s23 = sshll.u32 [#allocation4], 4
      %s24 = int_to_ptr.vmem [resolvable:$true] %s23
      %26 = dma.hbm_to_vmem [thread:$0]  %s0, 128, %s24, [#allocation5]
    $region5: #{tpu_custom_call.1} parent=1 // pred_fallthru
      _
    // Predicated region
    $region6: #{tpu_custom_call.1} parent=1 // pred_check
      _
    $region7: #{tpu_custom_call.1} parent=1 // pred_check_branch
      %28 = sbr.rel (0) target = $region9
    $region8: #{tpu_custom_call.1} parent=1 // pred_region
      %s30 = ssub.s32 128, 128
      %31 = vsyncadd [#allocation8], %s30
      %s33 = sshll.u32 [#allocation7], 4
      %s34 = int_to_ptr.vmem [resolvable:$true] %s33
      %36 = dma.hbm_to_vmem [thread:$0]  %s1, 128, %s34, [#allocation8]
    $region9: #{tpu_custom_call.1} parent=1 // pred_fallthru
      _
    // Predicated region
    $region10: #{tpu_custom_call.1} parent=1 // pred_check
      _
    $region11: #{tpu_custom_call.1} parent=1 // pred_check_branch
      %38 = sbr.rel (0) target = $region13
    $region12: #{tpu_custom_call.1} parent=1 // pred_region
      %s40 = ssub.s32 128, 128
      %41 = vsyncadd [#allocation8], %s40
      %s43 = sshll.u32 [#allocation9], 4
      %s44 = int_to_ptr.vmem [resolvable:$true] %s43
      %46 = dma.hbm_to_vmem [thread:$0]  %s2, 128, %s44, [#allocation8]
    $region13: #{tpu_custom_call.1} parent=1 // pred_fallthru
      _
    // Predicated region
    $region14: #{tpu_custom_call.1} parent=1 // pred_check
      _
    $region15: #{tpu_custom_call.1} parent=1 // pred_check_branch
      %48 = sbr.rel (0) target = $region17
    $region16: #{tpu_custom_call.1} parent=1 // pred_region
      %s50 = ssub.s32 16384, 16384
      %51 = vsyncadd [#allocation11], %s50
      %s52 = sshll.u32 [#allocation10], 4
      %s53 = int_to_ptr.vmem [resolvable:$true] %s52
      %58 = dma.hbm_to_vmem [thread:$0]  %s3, 16384, %s53, [#allocation11], 512, 512, 32
    $region17: #{tpu_custom_call.1} parent=1 // pred_fallthru
      _
    // Predicated region
    $region18: #{tpu_custom_call.1} parent=1 // pred_check
      _
    $region19: #{tpu_custom_call.1} parent=1 // pred_check_branch
      %60 = sbr.rel (0) target = $region21
    $region20: #{tpu_custom_call.1} parent=1 // pred_region
      _
    $region21: #{tpu_custom_call.1} parent=1 // pred_fallthru
      _
    // Predicated region
    $region22: #{tpu_custom_call.1} parent=1 // pred_check
      _
    $region23: #{tpu_custom_call.1} parent=1 // pred_check_branch
      %62 = sbr.rel (0) target = $region25
    $region24: #{tpu_custom_call.1} parent=1 // pred_region
      %63 = dma.done [#allocation5], 128
    $region25: #{tpu_custom_call.1} parent=1 // pred_fallthru
      _
    // Predicated region
    $region26: #{tpu_custom_call.1} parent=1 // pred_check
      _
    $region27: #{tpu_custom_call.1} parent=1 // pred_check_branch
      %65 = sbr.rel (0) target = $region29
    $region28: #{tpu_custom_call.1} parent=1 // pred_region
      %66 = dma.done [#allocation8], 128
    $region29: #{tpu_custom_call.1} parent=1 // pred_fallthru
      _
    // Predicated region
    $region30: #{tpu_custom_call.1} parent=1 // pred_check
      _
    $region31: #{tpu_custom_call.1} parent=1 // pred_check_branch
      %68 = sbr.rel (0) target = $region33
    $region32: #{tpu_custom_call.1} parent=1 // pred_region
      %69 = dma.done [#allocation8], 128
    $region33: #{tpu_custom_call.1} parent=1 // pred_fallthru
      _
    // Predicated region
    $region34: #{tpu_custom_call.1} parent=1 // pred_check
      _
    $region35: #{tpu_custom_call.1} parent=1 // pred_check_branch
      %71 = sbr.rel (0) target = $region37
    $region36: #{tpu_custom_call.1} parent=1 // pred_region
      %72 = dma.done [#allocation11], 16384
    $region37: #{tpu_custom_call.1} parent=1 // pred_fallthru
      _
    %p73 = scmp.eq.s32.totalorder 0, 0
    // Predicated region
    $region38: #{tpu_custom_call.1} parent=1 // pred_check
      %p74 = pneg %p73
    $region39: #{tpu_custom_call.1} parent=1 // pred_check_branch
      %76 = sbr.rel (%p74) target = $region41
    $region40: #{tpu_custom_call.1} parent=1 // pred_region
      %v77 = vld [vmem:[#allocation7] sm:$0xff]
      %78 = vst [vmem:[#allocation2] sm:$0xff] %v77
      %v79 = vld [vmem:[#allocation9] sm:$0xff]
      %80 = vst [vmem:[#allocation3] sm:$0xff] %v79
    $region41: #{tpu_custom_call.1} parent=1 // pred_fallthru
      _
    %v81 = vld [vmem:[#allocation4] sm:$0xff]
    %v82 = vld [vmem:[#allocation2] sm:$0xff]
    %v83 = vld [vmem:[#allocation3] sm:$0xff]
    %v84 = vld [vmem:[#allocation10] sm:$0xff]
    %v85 = vld [vmem:[#allocation10 + $0x8] sm:$0xff]
    %v86 = vld [vmem:[#allocation10 + $0x10] sm:$0xff]
    %v87 = vld [vmem:[#allocation10 + $0x18] sm:$0xff]
    %v88 = vld [vmem:[#allocation10 + $0x20] sm:$0xff]
    %v89 = vld [vmem:[#allocation10 + $0x28] sm:$0xff]
    %v90 = vld [vmem:[#allocation10 + $0x30] sm:$0xff]
    %v91 = vld [vmem:[#allocation10 + $0x38] sm:$0xff]
    %v92 = vld [vmem:[#allocation10 + $0x40] sm:$0xff]
    %v93 = vld [vmem:[#allocation10 + $0x48] sm:$0xff]
    %v94 = vld [vmem:[#allocation10 + $0x50] sm:$0xff]
    %v95 = vld [vmem:[#allocation10 + $0x58] sm:$0xff]
    %v96 = vld [vmem:[#allocation10 + $0x60] sm:$0xff]
    %v97 = vld [vmem:[#allocation10 + $0x68] sm:$0xff]
    %v98 = vld [vmem:[#allocation10 + $0x70] sm:$0xff]
    %v99 = vld [vmem:[#allocation10 + $0x78] sm:$0xff]
    %v100 = vld [vmem:[#allocation10 + $0x80] sm:$0xff]
    %v101 = vld [vmem:[#allocation10 + $0x88] sm:$0xff]
    %v102 = vld [vmem:[#allocation10 + $0x90] sm:$0xff]
    %v103 = vld [vmem:[#allocation10 + $0x98] sm:$0xff]
    %v104 = vld [vmem:[#allocation10 + $0xa0] sm:$0xff]
    %v105 = vld [vmem:[#allocation10 + $0xa8] sm:$0xff]
    %v106 = vld [vmem:[#allocation10 + $0xb0] sm:$0xff]
    %v107 = vld [vmem:[#allocation10 + $0xb8] sm:$0xff]
    %v108 = vld [vmem:[#allocation10 + $0xc0] sm:$0xff]
    %v109 = vld [vmem:[#allocation10 + $0xc8] sm:$0xff]
    %v110 = vld [vmem:[#allocation10 + $0xd0] sm:$0xff]
    %v111 = vld [vmem:[#allocation10 + $0xd8] sm:$0xff]
    %v112 = vld [vmem:[#allocation10 + $0xe0] sm:$0xff]
    %v113 = vld [vmem:[#allocation10 + $0xe8] sm:$0xff]
    %v114 = vld [vmem:[#allocation10 + $0xf0] sm:$0xff]
    %v115 = vld [vmem:[#allocation10 + $0xf8] sm:$0xff]
    %v116 = vld [vmem:[#allocation10 + $0x100] sm:$0xff]
    %v117 = vld [vmem:[#allocation10 + $0x108] sm:$0xff]
    %v118 = vld [vmem:[#allocation10 + $0x110] sm:$0xff]
    %v119 = vld [vmem:[#allocation10 + $0x118] sm:$0xff]
    %v120 = vld [vmem:[#allocation10 + $0x120] sm:$0xff]
    %v121 = vld [vmem:[#allocation10 + $0x128] sm:$0xff]
    %v122 = vld [vmem:[#allocation10 + $0x130] sm:$0xff]
    %v123 = vld [vmem:[#allocation10 + $0x138] sm:$0xff]
    %v124 = vld [vmem:[#allocation10 + $0x140] sm:$0xff]
    %v125 = vld [vmem:[#allocation10 + $0x148] sm:$0xff]
    %v126 = vld [vmem:[#allocation10 + $0x150] sm:$0xff]
    %v127 = vld [vmem:[#allocation10 + $0x158] sm:$0xff]
    %v128 = vld [vmem:[#allocation10 + $0x160] sm:$0xff]
    %v129 = vld [vmem:[#allocation10 + $0x168] sm:$0xff]
    %v130 = vld [vmem:[#allocation10 + $0x170] sm:$0xff]
    %v131 = vld [vmem:[#allocation10 + $0x178] sm:$0xff]
    %v132 = vld [vmem:[#allocation10 + $0x180] sm:$0xff]
    %v133 = vld [vmem:[#allocation10 + $0x188] sm:$0xff]
    %v134 = vld [vmem:[#allocation10 + $0x190] sm:$0xff]
    %v135 = vld [vmem:[#allocation10 + $0x198] sm:$0xff]
    %v136 = vld [vmem:[#allocation10 + $0x1a0] sm:$0xff]
    %v137 = vld [vmem:[#allocation10 + $0x1a8] sm:$0xff]
    %v138 = vld [vmem:[#allocation10 + $0x1b0] sm:$0xff]
    %v139 = vld [vmem:[#allocation10 + $0x1b8] sm:$0xff]
    %v140 = vld [vmem:[#allocation10 + $0x1c0] sm:$0xff]
    %v141 = vld [vmem:[#allocation10 + $0x1c8] sm:$0xff]
    %v142 = vld [vmem:[#allocation10 + $0x1d0] sm:$0xff]
    %v143 = vld [vmem:[#allocation10 + $0x1d8] sm:$0xff]
    %v144 = vld [vmem:[#allocation10 + $0x1e0] sm:$0xff]
    %v145 = vld [vmem:[#allocation10 + $0x1e8] sm:$0xff]
    %v146 = vld [vmem:[#allocation10 + $0x1f0] sm:$0xff]
    %v147 = vld [vmem:[#allocation10 + $0x1f8] sm:$0xff]
    %v148 = vld [vmem:[#allocation10 + $0x200] sm:$0xff]
    %v149 = vld [vmem:[#allocation10 + $0x208] sm:$0xff]
    %v150 = vld [vmem:[#allocation10 + $0x210] sm:$0xff]
    %v151 = vld [vmem:[#allocation10 + $0x218] sm:$0xff]
    %v152 = vld [vmem:[#allocation10 + $0x220] sm:$0xff]
    %v153 = vld [vmem:[#allocation10 + $0x228] sm:$0xff]
    %v154 = vld [vmem:[#allocation10 + $0x230] sm:$0xff]
    %v155 = vld [vmem:[#allocation10 + $0x238] sm:$0xff]
    %v156 = vld [vmem:[#allocation10 + $0x240] sm:$0xff]
    %v157 = vld [vmem:[#allocation10 + $0x248] sm:$0xff]
    %v158 = vld [vmem:[#allocation10 + $0x250] sm:$0xff]
    %v159 = vld [vmem:[#allocation10 + $0x258] sm:$0xff]
    %v160 = vld [vmem:[#allocation10 + $0x260] sm:$0xff]
    %v161 = vld [vmem:[#allocation10 + $0x268] sm:$0xff]
    %v162 = vld [vmem:[#allocation10 + $0x270] sm:$0xff]
    %v163 = vld [vmem:[#allocation10 + $0x278] sm:$0xff]
    %v164 = vld [vmem:[#allocation10 + $0x280] sm:$0xff]
    %v165 = vld [vmem:[#allocation10 + $0x288] sm:$0xff]
    %v166 = vld [vmem:[#allocation10 + $0x290] sm:$0xff]
    %v167 = vld [vmem:[#allocation10 + $0x298] sm:$0xff]
    %v168 = vld [vmem:[#allocation10 + $0x2a0] sm:$0xff]
    %v169 = vld [vmem:[#allocation10 + $0x2a8] sm:$0xff]
    %v170 = vld [vmem:[#allocation10 + $0x2b0] sm:$0xff]
    %v171 = vld [vmem:[#allocation10 + $0x2b8] sm:$0xff]
    %v172 = vld [vmem:[#allocation10 + $0x2c0] sm:$0xff]
    %v173 = vld [vmem:[#allocation10 + $0x2c8] sm:$0xff]
    %v174 = vld [vmem:[#allocation10 + $0x2d0] sm:$0xff]
    %v175 = vld [vmem:[#allocation10 + $0x2d8] sm:$0xff]
    %v176 = vld [vmem:[#allocation10 + $0x2e0] sm:$0xff]
    %v177 = vld [vmem:[#allocation10 + $0x2e8] sm:$0xff]
    %v178 = vld [vmem:[#allocation10 + $0x2f0] sm:$0xff]
    %v179 = vld [vmem:[#allocation10 + $0x2f8] sm:$0xff]
    %v180 = vld [vmem:[#allocation10 + $0x300] sm:$0xff]
    %v181 = vld [vmem:[#allocation10 + $0x308] sm:$0xff]
    %v182 = vld [vmem:[#allocation10 + $0x310] sm:$0xff]
    %v183 = vld [vmem:[#allocation10 + $0x318] sm:$0xff]
    %v184 = vld [vmem:[#allocation10 + $0x320] sm:$0xff]
    %v185 = vld [vmem:[#allocation10 + $0x328] sm:$0xff]
    %v186 = vld [vmem:[#allocation10 + $0x330] sm:$0xff]
    %v187 = vld [vmem:[#allocation10 + $0x338] sm:$0xff]
    %v188 = vld [vmem:[#allocation10 + $0x340] sm:$0xff]
    %v189 = vld [vmem:[#allocation10 + $0x348] sm:$0xff]
    %v190 = vld [vmem:[#allocation10 + $0x350] sm:$0xff]
    %v191 = vld [vmem:[#allocation10 + $0x358] sm:$0xff]
    %v192 = vld [vmem:[#allocation10 + $0x360] sm:$0xff]
    %v193 = vld [vmem:[#allocation10 + $0x368] sm:$0xff]
    %v194 = vld [vmem:[#allocation10 + $0x370] sm:$0xff]
    %v195 = vld [vmem:[#allocation10 + $0x378] sm:$0xff]
    %v196 = vld [vmem:[#allocation10 + $0x380] sm:$0xff]
    %v197 = vld [vmem:[#allocation10 + $0x388] sm:$0xff]
    %v198 = vld [vmem:[#allocation10 + $0x390] sm:$0xff]
    %v199 = vld [vmem:[#allocation10 + $0x398] sm:$0xff]
    %v200 = vld [vmem:[#allocation10 + $0x3a0] sm:$0xff]
    %v201 = vld [vmem:[#allocation10 + $0x3a8] sm:$0xff]
    %v202 = vld [vmem:[#allocation10 + $0x3b0] sm:$0xff]
    %v203 = vld [vmem:[#allocation10 + $0x3b8] sm:$0xff]
    %v204 = vld [vmem:[#allocation10 + $0x3c0] sm:$0xff]
    %v205 = vld [vmem:[#allocation10 + $0x3c8] sm:$0xff]
    %v206 = vld [vmem:[#allocation10 + $0x3d0] sm:$0xff]
    %v207 = vld [vmem:[#allocation10 + $0x3d8] sm:$0xff]
    %v208 = vld [vmem:[#allocation10 + $0x3e0] sm:$0xff]
    %v209 = vld [vmem:[#allocation10 + $0x3e8] sm:$0xff]
    %v210 = vld [vmem:[#allocation10 + $0x3f0] sm:$0xff]
    %v211 = vld [vmem:[#allocation10 + $0x3f8] sm:$0xff]
    %v212 = vld [vmem:[%s4] sm:$0xf]
    %v214 = vlaneseq
    %v215 = vshrl.u32 %v214, 7
    %v216 = vsub.s32 0, %v215
    %v217 = vrot.slane %v212, %v216
    %v218 = vlaneseq
    %v219 = vshrl.u32 %v218, 7
    %v220 = vsub.s32 1, %v219
    %v221 = vrot.slane %v212, %v220
    %v222 = vlaneseq
    %v223 = vshrl.u32 %v222, 7
    %v224 = vsub.s32 2, %v223
    %v225 = vrot.slane %v212, %v224
    %v226 = vlaneseq
    %v227 = vshrl.u32 %v226, 7
    %v228 = vsub.s32 3, %v227
    %v229 = vrot.slane %v212, %v228
    %234 = vmatprep.subr.mxu0 %v85
    %235 = vmatpush1.msra.mxu0 %v84
    %236 = vmatprep.subr.mxu0 %v89
    %237 = vmatpush1.msra.mxu0 %v88
    %238 = vmatprep.subr.mxu0 %v93
    %239 = vmatpush1.msra.mxu0 %v92
    %240 = vmatprep.subr.mxu0 %v97
    %241 = vmatpush1.msra.mxu0 %v96
    %242 = vmatprep.subr.mxu0 %v101
    %243 = vmatpush1.msra.mxu0 %v100
    %244 = vmatprep.subr.mxu0 %v105
    %245 = vmatpush1.msra.mxu0 %v104
    %246 = vmatprep.subr.mxu0 %v109
    %247 = vmatpush1.msra.mxu0 %v108
    %248 = vmatprep.subr.mxu0 %v113
    %249 = vmatpush1.msra.mxu0 %v112
    %250 = vmatprep.subr.mxu0 %v117
    %251 = vmatpush1.msra.mxu0 %v116
    %252 = vmatprep.subr.mxu0 %v121
    %253 = vmatpush1.msra.mxu0 %v120
    %254 = vmatprep.subr.mxu0 %v125
    %255 = vmatpush1.msra.mxu0 %v124
    %256 = vmatprep.subr.mxu0 %v129
    %257 = vmatpush1.msra.mxu0 %v128
    %258 = vmatprep.subr.mxu0 %v133
    %259 = vmatpush1.msra.mxu0 %v132
    %260 = vmatprep.subr.mxu0 %v137
    %261 = vmatpush1.msra.mxu0 %v136
    %262 = vmatprep.subr.mxu0 %v141
    %263 = vmatpush1.msra.mxu0 %v140
    %264 = vmatprep.subr.mxu0 %v145
    %265 = vmatpush1.msra.mxu0 %v144
    %266 = vmatprep.subr.mxu0 %v149
    %267 = vmatpush1.msra.mxu0 %v148
    %268 = vmatprep.subr.mxu0 %v153
    %269 = vmatpush1.msra.mxu0 %v152
    %270 = vmatprep.subr.mxu0 %v157
    %271 = vmatpush1.msra.mxu0 %v156
    %272 = vmatprep.subr.mxu0 %v161
    %273 = vmatpush1.msra.mxu0 %v160
    %274 = vmatprep.subr.mxu0 %v165
    %275 = vmatpush1.msra.mxu0 %v164
    %276 = vmatprep.subr.mxu0 %v169
    %277 = vmatpush1.msra.mxu0 %v168
    %278 = vmatprep.subr.mxu0 %v173
    %279 = vmatpush1.msra.mxu0 %v172
    %280 = vmatprep.subr.mxu0 %v177
    %281 = vmatpush1.msra.mxu0 %v176
    %282 = vmatprep.subr.mxu0 %v181
    %283 = vmatpush1.msra.mxu0 %v180
    %284 = vmatprep.subr.mxu0 %v185
    %285 = vmatpush1.msra.mxu0 %v184
    %286 = vmatprep.subr.mxu0 %v189
    %287 = vmatpush1.msra.mxu0 %v188
    %288 = vmatprep.subr.mxu0 %v193
    %289 = vmatpush1.msra.mxu0 %v192
    %290 = vmatprep.subr.mxu0 %v197
    %291 = vmatpush1.msra.mxu0 %v196
    %292 = vmatprep.subr.mxu0 %v201
    %293 = vmatpush1.msra.mxu0 %v200
    %294 = vmatprep.subr.mxu0 %v205
    %295 = vmatpush1.msra.mxu0 %v204
    %296 = vmatprep.subr.mxu0 %v209
    %297 = vmatpush1.msra.mxu0 %v208
    %298 = vmatprep.mubr.f32.mxu0 %v82
    %299 = vmatmul.mubr.f32.gmra.mrb[0].mxu0 %v81
    %v300 = vpop.f32.mrb[0].mxu0
    %v301 = vadd.f32 %v217, %v300
    %v302 = vpop.f32.mrb[0].mxu0
    %v303 = vadd.f32 %v221, %v302
    %304 = vdwg.mxu0
    %305 = vmatprep.subr.mxu0 %v87
    %306 = vmatpush1.msra.mxu0 %v86
    %307 = vmatprep.subr.mxu0 %v91
    %308 = vmatpush1.msra.mxu0 %v90
    %309 = vmatprep.subr.mxu0 %v95
    %310 = vmatpush1.msra.mxu0 %v94
    %311 = vmatprep.subr.mxu0 %v99
    %312 = vmatpush1.msra.mxu0 %v98
    %313 = vmatprep.subr.mxu0 %v103
    %314 = vmatpush1.msra.mxu0 %v102
    %315 = vmatprep.subr.mxu0 %v107
    %316 = vmatpush1.msra.mxu0 %v106
    %317 = vmatprep.subr.mxu0 %v111
    %318 = vmatpush1.msra.mxu0 %v110
    %319 = vmatprep.subr.mxu0 %v115
    %320 = vmatpush1.msra.mxu0 %v114
    %321 = vmatprep.subr.mxu0 %v119
    %322 = vmatpush1.msra.mxu0 %v118
    %323 = vmatprep.subr.mxu0 %v123
    %324 = vmatpush1.msra.mxu0 %v122
    %325 = vmatprep.subr.mxu0 %v127
    %326 = vmatpush1.msra.mxu0 %v126
    %327 = vmatprep.subr.mxu0 %v131
    %328 = vmatpush1.msra.mxu0 %v130
    %329 = vmatprep.subr.mxu0 %v135
    %330 = vmatpush1.msra.mxu0 %v134
    %331 = vmatprep.subr.mxu0 %v139
    %332 = vmatpush1.msra.mxu0 %v138
    %333 = vmatprep.subr.mxu0 %v143
    %334 = vmatpush1.msra.mxu0 %v142
    %335 = vmatprep.subr.mxu0 %v147
    %336 = vmatpush1.msra.mxu0 %v146
    %337 = vmatprep.subr.mxu0 %v151
    %338 = vmatpush1.msra.mxu0 %v150
    %339 = vmatprep.subr.mxu0 %v155
    %340 = vmatpush1.msra.mxu0 %v154
    %341 = vmatprep.subr.mxu0 %v159
    %342 = vmatpush1.msra.mxu0 %v158
    %343 = vmatprep.subr.mxu0 %v163
    %344 = vmatpush1.msra.mxu0 %v162
    %345 = vmatprep.subr.mxu0 %v167
    %346 = vmatpush1.msra.mxu0 %v166
    %347 = vmatprep.subr.mxu0 %v171
    %348 = vmatpush1.msra.mxu0 %v170
    %349 = vmatprep.subr.mxu0 %v175
    %350 = vmatpush1.msra.mxu0 %v174
    %351 = vmatprep.subr.mxu0 %v179
    %352 = vmatpush1.msra.mxu0 %v178
    %353 = vmatprep.subr.mxu0 %v183
    %354 = vmatpush1.msra.mxu0 %v182
    %355 = vmatprep.subr.mxu0 %v187
    %356 = vmatpush1.msra.mxu0 %v186
    %357 = vmatprep.subr.mxu0 %v191
    %358 = vmatpush1.msra.mxu0 %v190
    %359 = vmatprep.subr.mxu0 %v195
    %360 = vmatpush1.msra.mxu0 %v194
    %361 = vmatprep.subr.mxu0 %v199
    %362 = vmatpush1.msra.mxu0 %v198
    %363 = vmatprep.subr.mxu0 %v203
    %364 = vmatpush1.msra.mxu0 %v202
    %365 = vmatprep.subr.mxu0 %v207
    %366 = vmatpush1.msra.mxu0 %v206
    %367 = vmatprep.subr.mxu0 %v211
    %368 = vmatpush1.msra.mxu0 %v210
    %369 = vmatprep.mubr.f32.mxu0 %v82
    %370 = vmatmul.mubr.f32.gmra.mrb[0].mxu0 %v81
    %v371 = vpop.f32.mrb[0].mxu0
    %v372 = vadd.f32 %v225, %v371
    %v373 = vpop.f32.mrb[0].mxu0
    %v374 = vadd.f32 %v229, %v373
    %375 = vdwg.mxu0
    %v376 = vmul.f32 %v301, %v83
    %v377 = vmul.f32 %v303, %v374
    %v378 = vadd.f32 %v376, %v377
    %v379 = vtanh.pop %v378
    %v380 = vmul.f32 %v372, %v379
    %381 = vst [vmem:[#allocation2] sm:$0xff] %v380
    %382 = vst [vmem:[#allocation3] sm:$0xff] %v378
    %383 = vst [vmem:[#allocation12] sm:$0xff] %v380
    // Predicated region
    $region42: #{tpu_custom_call.1} parent=1 // pred_check
      %p384 = pneg %p73
    $region43: #{tpu_custom_call.1} parent=1 // pred_check_branch
      %386 = sbr.rel (%p384) target = $region45
    $region44: #{tpu_custom_call.1} parent=1 // pred_region
      %387 = vst [vmem:[#allocation13] sm:$0xff] %v378
    $region45: #{tpu_custom_call.1} parent=1 // pred_fallthru
      _
    // Predicated region
    $region46: #{tpu_custom_call.1} parent=1 // pred_check
      _
    $region47: #{tpu_custom_call.1} parent=1 // pred_check_branch
      %389 = sbr.rel (0) target = $region49
    $region48: #{tpu_custom_call.1} parent=1 // pred_region
      %s391 = ssub.s32 128, 128
      %392 = vsyncadd [#allocation6], %s391
      %s394 = sshll.u32 [#allocation12], 4
      %s395 = int_to_ptr.vmem [resolvable:$true] %s394
      %397 = dma.vmem_to_hbm [thread:$0]  %s395, 128, %s5, [#allocation6]
    $region49: #{tpu_custom_call.1} parent=1 // pred_fallthru
      _
    // Predicated region
    $region50: #{tpu_custom_call.1} parent=1 // pred_check
      _
    $region51: #{tpu_custom_call.1} parent=1 // pred_check_branch
      %399 = sbr.rel (0) target = $region53
    $region52: #{tpu_custom_call.1} parent=1 // pred_region
      %s401 = ssub.s32 128, 128
      %402 = vsyncadd [#allocation14], %s401
      %s404 = sshll.u32 [#allocation13], 4
      %s405 = int_to_ptr.vmem [resolvable:$true] %s404
      %407 = dma.vmem_to_hbm [thread:$0]  %s405, 128, %s6, [#allocation14]
    $region53: #{tpu_custom_call.1} parent=1 // pred_fallthru
      _
    // Predicated region
    $region54: #{tpu_custom_call.1} parent=1 // pred_check
      _
    $region55: #{tpu_custom_call.1} parent=1 // pred_check_branch
      %409 = sbr.rel (0) target = $region57
    $region56: #{tpu_custom_call.1} parent=1 // pred_region
      %410 = dma.done [#allocation6], 128
    $region57: #{tpu_custom_call.1} parent=1 // pred_fallthru
      _
    // Predicated region
    $region58: #{tpu_custom_call.1} parent=1 // pred_check
      _
    $region59: #{tpu_custom_call.1} parent=1 // pred_check_branch
      %412 = sbr.rel (0) target = $region61
    $region60: #{tpu_custom_call.1} parent=1 // pred_region
      %413 = dma.done [#allocation14], 128
    $region61: #{tpu_custom_call.1} parent=1 // pred_fallthru
      _
    %414 = vsyncpa [#allocation5], 1
    %415 = vsyncpa [#allocation8], 1
    %416 = vsyncpa [#allocation11], 1
    %417 = vsyncpa [#allocation6], 1
    %418 = vsyncpa [#allocation14], 1

</llo_original>
